<compile_context>
chip_gen: v7x
topology: tpu7x:2x2x1
jax: 0.10.0
libtpu: 0.0.40
codegen_flags: <defaults>
</compile_context>

<pallas_src>
import jax
import jax.numpy as jnp
from jax.experimental import pallas as pl
from jax.experimental.pallas import tpu as pltpu


# --------------------------------------------------------------------------
# Capability probe: can Mosaic lower (rows, out) -> (rows//pack, pack*out)
# inside a kernel (the lane-dense packed-slab store)?  Value-checked so a
# "lowers but wrong" case also falls back to the safe layout.
# --------------------------------------------------------------------------
_PACK_PROBE_CACHE = {}


def _reshape_pack_supported(pack, out_features):
    key = (int(pack), int(out_features))
    if key in _PACK_PROBE_CACHE:
        return _PACK_PROBE_CACHE[key]

    rows, cols = 8 * pack, out_features

    def probe_kernel(x_ref, o_ref):
        o_ref[...] = x_ref[...].reshape(o_ref.shape)

    ok = True
    try:
        x = jnp.arange(rows * cols, dtype=jnp.float32).reshape(rows, cols)
        y = pl.pallas_call(
            probe_kernel,
            out_shape=jax.ShapeDtypeStruct((8, pack * cols), jnp.float32),
        )(x)
        y = jax.block_until_ready(y)
        ok = bool(jnp.array_equal(y, x.reshape(8, pack * cols)))
    except Exception:  # lowering not supported on this jax/libtpu -> fallback
        ok = False
    _PACK_PROBE_CACHE[key] = ok
    return ok


# --------------------------------------------------------------------------
# Kernel
# --------------------------------------------------------------------------
def _make_kernel(num_inputs, in_features, pack, out_features, matmul_dtype=None):
    """Fused 3-layer MLP kernel for `num_inputs` separate input tensors.

    matmul_dtype: optional narrow dtype (e.g. jnp.bfloat16) for the MXU
    operands (native bf16 MXU on v5e/v6e/v7x).  Accumulation stays f32 and
    all element-wise math (bias add, tanh) stays f32 (v5e-safe VPU/EUP).
    """

    def kernel(*refs):
        x_refs = refs[:num_inputs]
        w0_ref, b0_ref, w1_ref, b1_ref, w2_ref, b2_ref, o_ref = refs[num_inputs:]

        def mm(a, w):
            if matmul_dtype is not None:
                a = a.astype(matmul_dtype)
                w = w.astype(matmul_dtype)
            return jnp.dot(a, w, preferred_element_type=jnp.float32)

        # pre: h0 = concat(x_0..x_{n-1}) @ W0 + b0, computed WITHOUT the
        # concat: W0 is split row-wise via zero-cost ref views (pl.ds on the
        # ref) and the partial matmuls are accumulated.
        h0 = b0_ref[...]
        for i, x_ref in enumerate(x_refs):
            w_slice = w0_ref[pl.ds(i * in_features, in_features), :]
            h0 = h0 + mm(x_ref[...], w_slice)

        # linear1 + tanh, linear2 + tanh (tanh on the EUP, f32).
        h1 = jnp.tanh(mm(h0, w1_ref[...]) + b1_ref[...])
        out = jnp.tanh(mm(h1, w2_ref[...]) + b2_ref[...]).astype(o_ref.dtype)

        if pack > 1:
            # Lane-dense store: fold `pack` consecutive rows into one
            # 128-lane row (row-major), so the store is an unmasked vst and
            # the wrapper reshape back is free.
            out = out.reshape(out.shape[0] // pack, pack * out_features)
        o_ref[...] = out

    return kernel


# --------------------------------------------------------------------------
# Wrapper
# --------------------------------------------------------------------------
def _round_up(x, m):
    return ((x + m - 1) // m) * m


def mult_linear_net(inputs, params, *, tile_b=2048, matmul_dtype=None):
    """inputs: list of [batch, in_features] arrays (len == num_inputs).

    Equivalent of:
        y = pre(concat(inputs, dim=-1))
        x = tanh(linear1(y))
        return tanh(linear2(x))
    """
    w0, b0, w1, b1, w2, b2 = params
    num_inputs = len(inputs)
    batch, in_features = inputs[0].shape
    hidden_nodes = w1.shape[1]
    out_features = w2.shape[1]

    # ---- lane-dense output packing factor ---------------------------------
    pack = 1
    if 0 < out_features < 128 and 128 % out_features == 0:
        cand = 128 // out_features
        if _reshape_pack_supported(cand, out_features):
            pack = cand
    align = 8 * pack if pack > 1 else 8  # keeps every block dim (8,128)-legal

    # ---- batch tile / grid selection ---------------------------------------
    tile_b = max(align, min(int(tile_b), _round_up(batch, align)))
    tile_b = _round_up(tile_b, align)
    grid_n = pl.cdiv(batch, tile_b)
    if grid_n > 1 and grid_n % 2 == 1:
        grid_n += 1                       # even grid: v7x has 2 TensorCores
    tile_b = _round_up(pl.cdiv(batch, grid_n), align)   # balance tile sizes
    grid_n = pl.cdiv(batch, tile_b)
    if grid_n > 1 and grid_n % 2 == 1:
        grid_n += 1
    padded_batch = grid_n * tile_b

    if padded_batch != batch:             # pad so no ragged partial block
        pad = padded_batch - batch
        inputs = [jnp.pad(x, ((0, pad), (0, 0))) for x in inputs]

    # ---- specs --------------------------------------------------------------
    x_spec = pl.BlockSpec((tile_b, in_features), lambda i: (i, 0))
    # Constant index_map -> weight/bias blocks stay VMEM-resident across grid.
    resident = lambda a: pl.BlockSpec(a.shape, lambda i: (0, 0))
    out_rows, out_cols = tile_b // pack, pack * out_features
    out_spec = pl.BlockSpec((out_rows, out_cols), lambda i: (i, 0))

    flops = 2 * padded_batch * (num_inputs * in_features * in_features
                                + in_features * hidden_nodes
                                + hidden_nodes * out_features)
    transcendentals = padded_batch * (hidden_nodes + out_features)
    bytes_accessed = 4 * (padded_batch * (num_inputs * in_features + out_features)
                          + w0.size + b0.size + w1.size + b1.size
                          + w2.size + b2.size)

    kernel = _make_kernel(num_inputs, in_features, pack, out_features, matmul_dtype)

    packed = pl.pallas_call(
        kernel,
        out_shape=jax.ShapeDtypeStruct((padded_batch // pack, out_cols), jnp.float32),
        grid=(grid_n,),
        in_specs=[x_spec] * num_inputs + [
            resident(w0), resident(b0),
            resident(w1), resident(b1),
            resident(w2), resident(b2),
        ],
        out_specs=out_spec,
        compiler_params=pltpu.CompilerParams(
            dimension_semantics=("parallel",)),
        cost_estimate=pl.CostEstimate(
            flops=flops,
            transcendentals=transcendentals,
            bytes_accessed=bytes_accessed),
    )(*inputs, w0, b0, w1, b1, w2, b2)

    out = packed.reshape(padded_batch, out_features)   # free row-major reshape
    return out[:batch] if padded_batch != batch else out


# --------------------------------------------------------------------------
# Params / pure-JAX reference
# --------------------------------------------------------------------------
def init_params(key, in_features, hidden_nodes, out_features, num_inputs):
    """Deterministic synthetic init (PyTorch Linear-like uniform scale)."""

    def linear(k, fan_in, fan_out):
        kw, kb = jax.random.split(k)
        bound = 1.0 / jnp.sqrt(fan_in)
        # stored as [fan_in, fan_out] (transposed vs torch's [out, in])
        w = jax.random.uniform(kw, (fan_in, fan_out), jnp.float32, -bound, bound)
        b = jax.random.uniform(kb, (1, fan_out), jnp.float32, -bound, bound)
        return w, b

    k0, k1, k2 = jax.random.split(key, 3)
    w0, b0 = linear(k0, in_features * num_inputs, in_features)   # pre
    w1, b1 = linear(k1, in_features, hidden_nodes)               # linear1
    w2, b2 = linear(k2, hidden_nodes, out_features)              # linear2
    return (w0, b0, w1, b1, w2, b2)


def reference(inputs, params):
    w0, b0, w1, b1, w2, b2 = params
    x = jnp.concatenate(inputs, axis=-1)
    h0 = x @ w0 + b0
    h1 = jnp.tanh(h0 @ w1 + b1)
    return jnp.tanh(h1 @ w2 + b2)


# --------------------------------------------------------------------------
# Demo / self-check
# --------------------------------------------------------------------------
if __name__ == "__main__":
    in_features, hidden_nodes, out_features, num_inputs = 16, 32, 8, 2

    key = jax.random.PRNGKey(0)
    kp, *kx = jax.random.split(key, 1 + num_inputs)
    params = init_params(kp, in_features, hidden_nodes, out_features, num_inputs)

    # Main run: batch 1024 with 512-row tiles -> grid of 2 (even, so both v7x
    # TensorCores get one tile), lane-packed f32 output stores.
    batch = 1024
    inputs = [jax.random.normal(k, (batch, in_features), jnp.float32) for k in kx]
    out = jax.block_until_ready(mult_linear_net(inputs, params, tile_b=512))
    ref = reference(inputs, params)
    assert out.shape == (batch, out_features), out.shape
    assert jnp.allclose(out, ref, atol=1e-5, rtol=1e-5), "f32 mismatch vs reference"

    # Ragged batch: exercises the pad-to-tile path (same tile shapes -> reuses
    # the compiled kernel).
    ragged = [x[:1000] for x in inputs]
    out_r = jax.block_until_ready(mult_linear_net(ragged, params, tile_b=512))
    assert out_r.shape == (1000, out_features), out_r.shape
    assert jnp.allclose(out_r, ref[:1000], atol=1e-5, rtol=1e-5), "ragged mismatch"

    # bf16 MXU-operand path (f32 accumulate, f32 tanh/bias -> v5e-safe too);
    # looser tolerance since operands are rounded to bf16.
    out_bf16 = jax.block_until_ready(
        mult_linear_net(inputs, params, tile_b=512, matmul_dtype=jnp.bfloat16))
    assert jnp.allclose(out_bf16, ref, atol=5e-2, rtol=5e-2), "bf16 mismatch"

    print("KERNEL_OK")
</pallas_src>

<mosaic_0001>
module attributes {stable_mosaic.version = 11 : i64} {
  func.func @probe_kernel(%arg0: memref<128x8xf32, #tpu.memory_space<vmem>>, %arg1: memref<8x128xf32, #tpu.memory_space<vmem>>) attributes {dimension_semantics = [], scalar_prefetch = 0 : i64, scratch_operands = 0 : i64, tpu.core_type = #tpu.core_type<tc>} {
    %c0 = arith.constant 0 : index
    %c0_0 = arith.constant 0 : index
    %0 = vector.load %arg0[%c0, %c0_0] : memref<128x8xf32, #tpu.memory_space<vmem>>, vector<128x8xf32>
    %1 = vector.shape_cast %0 : vector<128x8xf32> to vector<8x128xf32>
    %c0_1 = arith.constant 0 : index
    %c0_2 = arith.constant 0 : index
    %2 = vector.load %arg1[%c0_1, %c0_2] : memref<8x128xf32, #tpu.memory_space<vmem>>, vector<8x128xf32>
    tpu.vector_store %arg1[%c0_1, %c0_2], %1 {strides = array<i32>} : memref<8x128xf32, #tpu.memory_space<vmem>>, vector<8x128xf32>,
    return
  }
}

module attributes {stable_mosaic.version = 11 : i64} {
  func.func @kernel(%arg0: i32, %arg1: memref<512x16xf32, #tpu.memory_space<vmem>>, %arg2: memref<512x16xf32, #tpu.memory_space<vmem>>, %arg3: memref<32x16xf32, #tpu.memory_space<vmem>>, %arg4: memref<1x16xf32, #tpu.memory_space<vmem>>, %arg5: memref<16x32xf32, #tpu.memory_space<vmem>>, %arg6: memref<1x32xf32, #tpu.memory_space<vmem>>, %arg7: memref<32x8xf32, #tpu.memory_space<vmem>>, %arg8: memref<1x8xf32, #tpu.memory_space<vmem>>, %arg9: memref<512x8xf32, #tpu.memory_space<vmem>>) attributes {dimension_semantics = [#tpu.dimension_semantics<parallel>], iteration_bounds = array<i64: 2>, scalar_prefetch = 0 : i64, scratch_operands = 0 : i64, tpu.core_type = #tpu.core_type<tc>, window_params = [{transform_indices = @transform_0, window_bounds = array<i64: 512, 16>}, {transform_indices = @transform_1, window_bounds = array<i64: 512, 16>}, {pipeline_mode = #tpu.pipeline_mode<synchronous>, transform_indices = @transform_2, window_bounds = array<i64: 32, 16>}, {pipeline_mode = #tpu.pipeline_mode<synchronous>, transform_indices = @transform_3, window_bounds = array<i64: 1, 16>}, {pipeline_mode = #tpu.pipeline_mode<synchronous>, transform_indices = @transform_4, window_bounds = array<i64: 16, 32>}, {pipeline_mode = #tpu.pipeline_mode<synchronous>, transform_indices = @transform_5, window_bounds = array<i64: 1, 32>}, {pipeline_mode = #tpu.pipeline_mode<synchronous>, transform_indices = @transform_6, window_bounds = array<i64: 32, 8>}, {pipeline_mode = #tpu.pipeline_mode<synchronous>, transform_indices = @transform_7, window_bounds = array<i64: 1, 8>}, {transform_indices = @transform_8, window_bounds = array<i64: 512, 8>}]} {
    %c0 = arith.constant 0 : index
    %c0_0 = arith.constant 0 : index
    %0 = vector.load %arg4[%c0, %c0_0] : memref<1x16xf32, #tpu.memory_space<vmem>>, vector<1x16xf32>
    %c0_1 = arith.constant 0 : index
    %c0_2 = arith.constant 0 : index
    %1 = vector.load %arg3[%c0_1, %c0_2] : memref<32x16xf32, #tpu.memory_space<vmem>>, vector<16x16xf32>
    %c0_3 = arith.constant 0 : index
    %c0_4 = arith.constant 0 : index
    %2 = vector.load %arg1[%c0_3, %c0_4] : memref<512x16xf32, #tpu.memory_space<vmem>>, vector<512x16xf32>
    %cst = arith.constant dense<0.000000e+00> : vector<512x16xf32>
    %3 = tpu.matmul %2, %1, %cst {dimension_numbers = #tpu.dot_dimension_numbers<[1], [0], [0], [1], [0, 0, 1, 1], [], []>} : vector<512x16xf32>, vector<16x16xf32>, vector<512x16xf32> -> vector<512x16xf32>
    %4 = vector.broadcast %0 : vector<1x16xf32> to vector<512x16xf32>
    %5 = arith.addf %4, %3 : vector<512x16xf32>
    %c16 = arith.constant 16 : index
    %c0_5 = arith.constant 0 : index
    %6 = vector.load %arg3[%c16, %c0_5] : memref<32x16xf32, #tpu.memory_space<vmem>>, vector<16x16xf32>
    %c0_6 = arith.constant 0 : index
    %c0_7 = arith.constant 0 : index
    %7 = vector.load %arg2[%c0_6, %c0_7] : memref<512x16xf32, #tpu.memory_space<vmem>>, vector<512x16xf32>
    %cst_8 = arith.constant dense<0.000000e+00> : vector<512x16xf32>
    %8 = tpu.matmul %7, %6, %cst_8 {dimension_numbers = #tpu.dot_dimension_numbers<[1], [0], [0], [1], [0, 0, 1, 1], [], []>} : vector<512x16xf32>, vector<16x16xf32>, vector<512x16xf32> -> vector<512x16xf32>
    %9 = arith.addf %5, %8 : vector<512x16xf32>
    %c0_9 = arith.constant 0 : index
    %c0_10 = arith.constant 0 : index
    %10 = vector.load %arg5[%c0_9, %c0_10] : memref<16x32xf32, #tpu.memory_space<vmem>>, vector<16x32xf32>
    %cst_11 = arith.constant dense<0.000000e+00> : vector<512x32xf32>
    %11 = tpu.matmul %9, %10, %cst_11 {dimension_numbers = #tpu.dot_dimension_numbers<[1], [0], [0], [1], [0, 0, 1, 1], [], []>} : vector<512x16xf32>, vector<16x32xf32>, vector<512x32xf32> -> vector<512x32xf32>
    %c0_12 = arith.constant 0 : index
    %c0_13 = arith.constant 0 : index
    %12 = vector.load %arg6[%c0_12, %c0_13] : memref<1x32xf32, #tpu.memory_space<vmem>>, vector<1x32xf32>
    %13 = vector.broadcast %12 : vector<1x32xf32> to vector<512x32xf32>
    %14 = arith.addf %11, %13 : vector<512x32xf32>
    %15 = math.tanh %14 : vector<512x32xf32>
    %c0_14 = arith.constant 0 : index
    %c0_15 = arith.constant 0 : index
    %16 = vector.load %arg7[%c0_14, %c0_15] : memref<32x8xf32, #tpu.memory_space<vmem>>, vector<32x8xf32>
    %cst_16 = arith.constant dense<0.000000e+00> : vector<512x8xf32>
    %17 = tpu.matmul %15, %16, %cst_16 {dimension_numbers = #tpu.dot_dimension_numbers<[1], [0], [0], [1], [0, 0, 1, 1], [], []>} : vector<512x32xf32>, vector<32x8xf32>, vector<512x8xf32> -> vector<512x8xf32>
    %c0_17 = arith.constant 0 : index
    %c0_18 = arith.constant 0 : index
    %18 = vector.load %arg8[%c0_17, %c0_18] : memref<1x8xf32, #tpu.memory_space<vmem>>, vector<1x8xf32>
    %19 = vector.broadcast %18 : vector<1x8xf32> to vector<512x8xf32>
    %20 = arith.addf %17, %19 : vector<512x8xf32>
    %21 = math.tanh %20 : vector<512x8xf32>
    %c0_19 = arith.constant 0 : index
    %c0_20 = arith.constant 0 : index
    %22 = vector.load %arg9[%c0_19, %c0_20] : memref<512x8xf32, #tpu.memory_space<vmem>>, vector<512x8xf32>
    tpu.vector_store %arg9[%c0_19, %c0_20], %21 {strides = array<i32>} : memref<512x8xf32, #tpu.memory_space<vmem>>, vector<512x8xf32>,
    return
  }
  func.func @transform_0(%arg0: i32) -> (i32, i32) {
    %c0_i32 = arith.constant 0 : i32
    %c0_i32_0 = arith.constant 0 : i32
    return %arg0, %c0_i32 : i32, i32
  }
  func.func @transform_1(%arg0: i32) -> (i32, i32) {
    %c0_i32 = arith.constant 0 : i32
    %c0_i32_0 = arith.constant 0 : i32
    return %arg0, %c0_i32 : i32, i32
  }
  func.func @transform_2(%arg0: i32) -> (i32, i32) {
    %c0_i32 = arith.constant 0 : i32
    %c0_i32_0 = arith.constant 0 : i32
    %c0_i32_1 = arith.constant 0 : i32
    return %c0_i32, %c0_i32_0 : i32, i32
  }
  func.func @transform_3(%arg0: i32) -> (i32, i32) {
    %c0_i32 = arith.constant 0 : i32
    %c0_i32_0 = arith.constant 0 : i32
    %c0_i32_1 = arith.constant 0 : i32
    return %c0_i32, %c0_i32_0 : i32, i32
  }
  func.func @transform_4(%arg0: i32) -> (i32, i32) {
    %c0_i32 = arith.constant 0 : i32
    %c0_i32_0 = arith.constant 0 : i32
    %c0_i32_1 = arith.constant 0 : i32
    return %c0_i32, %c0_i32_0 : i32, i32
  }
  func.func @transform_5(%arg0: i32) -> (i32, i32) {
    %c0_i32 = arith.constant 0 : i32
    %c0_i32_0 = arith.constant 0 : i32
    %c0_i32_1 = arith.constant 0 : i32
    return %c0_i32, %c0_i32_0 : i32, i32
  }
  func.func @transform_6(%arg0: i32) -> (i32, i32) {
    %c0_i32 = arith.constant 0 : i32
    %c0_i32_0 = arith.constant 0 : i32
    %c0_i32_1 = arith.constant 0 : i32
    return %c0_i32, %c0_i32_0 : i32, i32
  }
  func.func @transform_7(%arg0: i32) -> (i32, i32) {
    %c0_i32 = arith.constant 0 : i32
    %c0_i32_0 = arith.constant 0 : i32
    %c0_i32_1 = arith.constant 0 : i32
    return %c0_i32, %c0_i32_0 : i32, i32
  }
  func.func @transform_8(%arg0: i32) -> (i32, i32) {
    %c0_i32 = arith.constant 0 : i32
    %c0_i32_0 = arith.constant 0 : i32
    return %arg0, %c0_i32 : i32, i32
  }
}

</mosaic_0001>

<llo_original>
// kernel: tpu_custom_call.1
$region0: #{tpu_custom_call.1}
  #allocation0 [shape = 'u32[]', space=smem, size = 0x4, offset = 0x4, fixed_abs, tag = 'smem constant byte address 0x4 - core index']
  #allocation1 [shape = 'u32[144,128]{1,0:T(1,128)}', space=vmem, size = 0x12000, scoped, tag = 'internal scratch']
  %s0 = inlined_call_operand.vmem [shape: f32[1024,16], index: 0, kind: input, shape index: {}]
  %s1 = inlined_call_operand.vmem [shape: f32[1024,16], index: 1, kind: input, shape index: {}]
  %s2 = inlined_call_operand.vmem [shape: f32[32,16], index: 2, kind: input, shape index: {}]
  %s3 = inlined_call_operand.vmem [shape: f32[1,16], index: 3, kind: input, shape index: {}]
  %s4 = inlined_call_operand.vmem [shape: f32[16,32], index: 4, kind: input, shape index: {}]
  %s5 = inlined_call_operand.vmem [shape: f32[1,32], index: 5, kind: input, shape index: {}]
  %s6 = inlined_call_operand.vmem [shape: f32[32,8], index: 6, kind: input, shape index: {}]
  %s7 = inlined_call_operand.vmem [shape: f32[1,8], index: 7, kind: input, shape index: {}]
  %s8 = inlined_call_operand.vmem [shape: f32[1024,8], index: 8, kind: output, shape index: {}]
  %s9 = sld [smem:[#allocation0]]
  $region65: #{tpu_custom_call.1} parent=0
    _
  %s11 = ssub.s32 1, %s9
  %s12 = scalar_select 0, %s11, %s9
  loop: start=0, step=1, limit=4
  $region2: #{tpu_custom_call.1} parent=0 // loop_pre_header
    _
  $region3: #{tpu_custom_call.1} parent=0 // loop_header
    %s14 = sphi 0, %s18
    %p15 = scmp.ge.s32.totalorder %s14, 4
    %s24 = sphi 0, %s26
    %s27 = sphi 0, %s24
    %s28 = sphi 0, %s27
    %s44 = sphi 0, %s28
    %s50 = sphi 0, %s52
    %s53 = sphi 0, %s50
    %s54 = sphi 0, %s53
    %s70 = sphi 0, %s54
    %s74 = sphi 0, %s74
    %s76 = sphi 0, %s74
    %s77 = sphi 0, %s76
    %s91 = sphi 0, %s77
    %s95 = sphi 0, %s95
    %s97 = sphi 0, %s95
    %s98 = sphi 0, %s97
    %s112 = sphi 0, %s98
    %s116 = sphi 0, %s116
    %s118 = sphi 0, %s116
    %s119 = sphi 0, %s118
    %s133 = sphi 0, %s119
    %s137 = sphi 0, %s137
    %s139 = sphi 0, %s137
    %s140 = sphi 0, %s139
    %s154 = sphi 0, %s140
    %s158 = sphi 0, %s158
    %s160 = sphi 0, %s158
    %s161 = sphi 0, %s160
    %s175 = sphi 0, %s161
    %s179 = sphi 0, %s179
    %s181 = sphi 0, %s179
    %s182 = sphi 0, %s181
    %s196 = sphi 0, %s182
    %s202 = sphi 0, %s204
    %s205 = sphi 0, %s202
    %s206 = sphi 0, %s205
    %s222 = sphi 0, %s206
  $region4: #{tpu_custom_call.1} parent=0 // loop_header_branch
    %17 = sbr.rel (%p15) target = $region8
  $region5: #{tpu_custom_call.1} parent=0 // loop_body
    %s19 = ssub.s32 %s14, 1
    %s20 = ssub.s32 %s14, 2
    %s21 = sadd.s32 %s14, 1
    %s22 = ssub.s32 %s14, %s21
    %p23 = scmp.eq.s32.totalorder %s22, 0
    %s25 = sadd.s32 %s24, 1
    %s26 = scalar_select %p23, %s24, %s25
    %p29 = pneg %p23
    %p30 = scmp.eq.s32.totalorder %s14, 1
    %p31 = por %p29, %p30
    %p32 = scmp.ne.s32.totalorder %s24, %s27
    %p33 = scmp.eq.s32.totalorder %s14, 0
    %p34 = por %p32, %p33
    %p35 = scmp.ne.s32.totalorder %s24, %s27
    %p36 = scmp.eq.s32.totalorder %s19, 1
    %p37 = por %p35, %p36
    %p38 = scmp.ne.s32.totalorder %s27, %s28
    %p39 = scmp.eq.s32.totalorder %s19, 0
    %p40 = por %p38, %p39
    %p41 = scmp.ne.s32.totalorder %s27, %s28
    %p42 = scmp.eq.s32.totalorder %s20, 1
    %p43 = por %p41, %p42
    %p45 = scmp.ne.s32.totalorder %s28, %s44
    %p46 = scmp.eq.s32.totalorder %s20, 0
    %p47 = por %p45, %p46
    %s48 = ssub.s32 %s14, %s21
    %p49 = scmp.eq.s32.totalorder %s48, 0
    %s51 = sadd.s32 %s50, 1
    %s52 = scalar_select %p49, %s50, %s51
    %p55 = pneg %p49
    %p56 = scmp.eq.s32.totalorder %s14, 1
    %p57 = por %p55, %p56
    %p58 = scmp.ne.s32.totalorder %s50, %s53
    %p59 = scmp.eq.s32.totalorder %s14, 0
    %p60 = por %p58, %p59
    %p61 = scmp.ne.s32.totalorder %s50, %s53
    %p62 = scmp.eq.s32.totalorder %s19, 1
    %p63 = por %p61, %p62
    %p64 = scmp.ne.s32.totalorder %s53, %s54
    %p65 = scmp.eq.s32.totalorder %s19, 0
    %p66 = por %p64, %p65
    %p67 = scmp.ne.s32.totalorder %s53, %s54
    %p68 = scmp.eq.s32.totalorder %s20, 1
    %p69 = por %p67, %p68
    %p71 = scmp.ne.s32.totalorder %s54, %s70
    %p72 = scmp.eq.s32.totalorder %s20, 0
    %p73 = por %p71, %p72
    %s75 = sadd.s32 %s74, 1
    %p78 = scmp.eq.s32.totalorder %s14, 1
    %p79 = scmp.ne.s32.totalorder %s74, %s76
    %p80 = scmp.eq.s32.totalorder %s14, 0
    %p81 = por %p79, %p80
    %p82 = scmp.ne.s32.totalorder %s74, %s76
    %p83 = scmp.eq.s32.totalorder %s19, 1
    %p84 = por %p82, %p83
    %p85 = scmp.ne.s32.totalorder %s76, %s77
    %p86 = scmp.eq.s32.totalorder %s19, 0
    %p87 = por %p85, %p86
    %p88 = scmp.ne.s32.totalorder %s76, %s77
    %p89 = scmp.eq.s32.totalorder %s20, 1
    %p90 = por %p88, %p89
    %p92 = scmp.ne.s32.totalorder %s77, %s91
    %p93 = scmp.eq.s32.totalorder %s20, 0
    %p94 = por %p92, %p93
    %s96 = sadd.s32 %s95, 1
    %p99 = scmp.eq.s32.totalorder %s14, 1
    %p100 = scmp.ne.s32.totalorder %s95, %s97
    %p101 = scmp.eq.s32.totalorder %s14, 0
    %p102 = por %p100, %p101
    %p103 = scmp.ne.s32.totalorder %s95, %s97
    %p104 = scmp.eq.s32.totalorder %s19, 1
    %p105 = por %p103, %p104
    %p106 = scmp.ne.s32.totalorder %s97, %s98
    %p107 = scmp.eq.s32.totalorder %s19, 0
    %p108 = por %p106, %p107
    %p109 = scmp.ne.s32.totalorder %s97, %s98
    %p110 = scmp.eq.s32.totalorder %s20, 1
    %p111 = por %p109, %p110
    %p113 = scmp.ne.s32.totalorder %s98, %s112
    %p114 = scmp.eq.s32.totalorder %s20, 0
    %p115 = por %p113, %p114
    %s117 = sadd.s32 %s116, 1
    %p120 = scmp.eq.s32.totalorder %s14, 1
    %p121 = scmp.ne.s32.totalorder %s116, %s118
    %p122 = scmp.eq.s32.totalorder %s14, 0
    %p123 = por %p121, %p122
    %p124 = scmp.ne.s32.totalorder %s116, %s118
    %p125 = scmp.eq.s32.totalorder %s19, 1
    %p126 = por %p124, %p125
    %p127 = scmp.ne.s32.totalorder %s118, %s119
    %p128 = scmp.eq.s32.totalorder %s19, 0
    %p129 = por %p127, %p128
    %p130 = scmp.ne.s32.totalorder %s118, %s119
    %p131 = scmp.eq.s32.totalorder %s20, 1
    %p132 = por %p130, %p131
    %p134 = scmp.ne.s32.totalorder %s119, %s133
    %p135 = scmp.eq.s32.totalorder %s20, 0
    %p136 = por %p134, %p135
    %s138 = sadd.s32 %s137, 1
    %p141 = scmp.eq.s32.totalorder %s14, 1
    %p142 = scmp.ne.s32.totalorder %s137, %s139
    %p143 = scmp.eq.s32.totalorder %s14, 0
    %p144 = por %p142, %p143
    %p145 = scmp.ne.s32.totalorder %s137, %s139
    %p146 = scmp.eq.s32.totalorder %s19, 1
    %p147 = por %p145, %p146
    %p148 = scmp.ne.s32.totalorder %s139, %s140
    %p149 = scmp.eq.s32.totalorder %s19, 0
    %p150 = por %p148, %p149
    %p151 = scmp.ne.s32.totalorder %s139, %s140
    %p152 = scmp.eq.s32.totalorder %s20, 1
    %p153 = por %p151, %p152
    %p155 = scmp.ne.s32.totalorder %s140, %s154
    %p156 = scmp.eq.s32.totalorder %s20, 0
    %p157 = por %p155, %p156
    %s159 = sadd.s32 %s158, 1
    %p162 = scmp.eq.s32.totalorder %s14, 1
    %p163 = scmp.ne.s32.totalorder %s158, %s160
    %p164 = scmp.eq.s32.totalorder %s14, 0
    %p165 = por %p163, %p164
    %p166 = scmp.ne.s32.totalorder %s158, %s160
    %p167 = scmp.eq.s32.totalorder %s19, 1
    %p168 = por %p166, %p167
    %p169 = scmp.ne.s32.totalorder %s160, %s161
    %p170 = scmp.eq.s32.totalorder %s19, 0
    %p171 = por %p169, %p170
    %p172 = scmp.ne.s32.totalorder %s160, %s161
    %p173 = scmp.eq.s32.totalorder %s20, 1
    %p174 = por %p172, %p173
    %p176 = scmp.ne.s32.totalorder %s161, %s175
    %p177 = scmp.eq.s32.totalorder %s20, 0
    %p178 = por %p176, %p177
    %s180 = sadd.s32 %s179, 1
    %p183 = scmp.eq.s32.totalorder %s14, 1
    %p184 = scmp.ne.s32.totalorder %s179, %s181
    %p185 = scmp.eq.s32.totalorder %s14, 0
    %p186 = por %p184, %p185
    %p187 = scmp.ne.s32.totalorder %s179, %s181
    %p188 = scmp.eq.s32.totalorder %s19, 1
    %p189 = por %p187, %p188
    %p190 = scmp.ne.s32.totalorder %s181, %s182
    %p191 = scmp.eq.s32.totalorder %s19, 0
    %p192 = por %p190, %p191
    %p193 = scmp.ne.s32.totalorder %s181, %s182
    %p194 = scmp.eq.s32.totalorder %s20, 1
    %p195 = por %p193, %p194
    %p197 = scmp.ne.s32.totalorder %s182, %s196
    %p198 = scmp.eq.s32.totalorder %s20, 0
    %p199 = por %p197, %p198
    %s200 = ssub.s32 %s14, %s21
    %p201 = scmp.eq.s32.totalorder %s200, 0
    %s203 = sadd.s32 %s202, 1
    %s204 = scalar_select %p201, %s202, %s203
    %p207 = pneg %p201
    %p208 = scmp.eq.s32.totalorder %s14, 1
    %p209 = por %p207, %p208
    %p210 = scmp.ne.s32.totalorder %s202, %s205
    %p211 = scmp.eq.s32.totalorder %s14, 0
    %p212 = por %p210, %p211
    %p213 = scmp.ne.s32.totalorder %s202, %s205
    %p214 = scmp.eq.s32.totalorder %s19, 1
    %p215 = por %p213, %p214
    %p216 = scmp.ne.s32.totalorder %s205, %s206
    %p217 = scmp.eq.s32.totalorder %s19, 0
    %p218 = por %p216, %p217
    %p219 = scmp.ne.s32.totalorder %s205, %s206
    %p220 = scmp.eq.s32.totalorder %s20, 1
    %p221 = por %p219, %p220
    %p223 = scmp.ne.s32.totalorder %s206, %s222
    %p224 = scmp.eq.s32.totalorder %s20, 0
    %p225 = por %p223, %p224
    %p226 = scmp.le.s32.totalorder 1, %s14
    %p227 = scmp.lt.s32.totalorder %s14, 3
    %p228 = pnand %p226, %p227
    %p229 = pneg %p228
    // Predicated region
    $region9: #{tpu_custom_call.1} parent=5 // pred_check
      _
    $region10: #{tpu_custom_call.1} parent=5 // pred_check_branch
      %231 = sbr.rel (%p228) target = $region12
    $region11: #{tpu_custom_call.1} parent=5 // pred_region
      %s232 = ssub.s32 %s14, 1
      // Predicated region
      $region13: #{tpu_custom_call.1} parent=11 // pred_check
        %p233 = pneg %p87
      $region14: #{tpu_custom_call.1} parent=11 // pred_check_branch
        %235 = sbr.rel (%p233) target = $region16
      $region15: #{tpu_custom_call.1} parent=11 // pred_region
        _
      $region16: #{tpu_custom_call.1} parent=11 // pred_fallthru
        _
      // Predicated region
      $region17: #{tpu_custom_call.1} parent=11 // pred_check
        %p236 = pneg %p108
      $region18: #{tpu_custom_call.1} parent=11 // pred_check_branch
        %238 = sbr.rel (%p236) target = $region20
      $region19: #{tpu_custom_call.1} parent=11 // pred_region
        _
      $region20: #{tpu_custom_call.1} parent=11 // pred_fallthru
        _
      // Predicated region
      $region21: #{tpu_custom_call.1} parent=11 // pred_check
        %p239 = pneg %p129
      $region22: #{tpu_custom_call.1} parent=11 // pred_check_branch
        %241 = sbr.rel (%p239) target = $region24
      $region23: #{tpu_custom_call.1} parent=11 // pred_region
        _
      $region24: #{tpu_custom_call.1} parent=11 // pred_fallthru
        _
      // Predicated region
      $region25: #{tpu_custom_call.1} parent=11 // pred_check
        %p242 = pneg %p150
      $region26: #{tpu_custom_call.1} parent=11 // pred_check_branch
        %244 = sbr.rel (%p242) target = $region28
      $region27: #{tpu_custom_call.1} parent=11 // pred_region
        _
      $region28: #{tpu_custom_call.1} parent=11 // pred_fallthru
        _
      // Predicated region
      $region29: #{tpu_custom_call.1} parent=11 // pred_check
        %p245 = pneg %p171
      $region30: #{tpu_custom_call.1} parent=11 // pred_check_branch
        %247 = sbr.rel (%p245) target = $region32
      $region31: #{tpu_custom_call.1} parent=11 // pred_region
        _
      $region32: #{tpu_custom_call.1} parent=11 // pred_fallthru
        _
      // Predicated region
      $region33: #{tpu_custom_call.1} parent=11 // pred_check
        %p248 = pneg %p192
      $region34: #{tpu_custom_call.1} parent=11 // pred_check_branch
        %250 = sbr.rel (%p248) target = $region36
      $region35: #{tpu_custom_call.1} parent=11 // pred_region
        _
      $region36: #{tpu_custom_call.1} parent=11 // pred_fallthru
        _
    $region12: #{tpu_custom_call.1} parent=5 // pred_fallthru
      _
    %p251 = scmp.lt.s32.totalorder %s14, 2
    // Predicated region
    $region37: #{tpu_custom_call.1} parent=5 // pred_check
      %p252 = pneg %p251
    $region38: #{tpu_custom_call.1} parent=5 // pred_check_branch
      %254 = sbr.rel (%p252) target = $region40
    $region39: #{tpu_custom_call.1} parent=5 // pred_region
      // Predicated region
      $region41: #{tpu_custom_call.1} parent=39 // pred_check
        %p255 = pneg %p34
      $region42: #{tpu_custom_call.1} parent=39 // pred_check_branch
        %257 = sbr.rel (%p255) target = $region44
      $region43: #{tpu_custom_call.1} parent=39 // pred_region
        %s258 = smul.u32 64, %s14
        %p259 = scmp.lt.s32.totalorder %s258, 127
        %s260 = scalar_select %p259, %s258, 127
        %s261 = smul.addr %s260, 8
        %s262 = scalar_lea.vmem %s0, %s261
        %s263 = smul.u32 64, %s14
      $region44: #{tpu_custom_call.1} parent=39 // pred_fallthru
        _
      // Predicated region
      $region45: #{tpu_custom_call.1} parent=39 // pred_check
        %p264 = pneg %p60
      $region46: #{tpu_custom_call.1} parent=39 // pred_check_branch
        %266 = sbr.rel (%p264) target = $region48
      $region47: #{tpu_custom_call.1} parent=39 // pred_region
        %s267 = smul.u32 64, %s14
        %p268 = scmp.lt.s32.totalorder %s267, 127
        %s269 = scalar_select %p268, %s267, 127
        %s270 = smul.addr %s269, 8
        %s271 = scalar_lea.vmem %s1, %s270
        %s272 = smul.u32 64, %s14
      $region48: #{tpu_custom_call.1} parent=39 // pred_fallthru
        _
    $region40: #{tpu_custom_call.1} parent=5 // pred_fallthru
      _
    %p273 = scmp.le.s32.totalorder 1, %s14
    %p274 = scmp.lt.s32.totalorder %s14, 3
    %p275 = pnand %p273, %p274
    %p276 = pneg %p275
    // Predicated region
    $region49: #{tpu_custom_call.1} parent=5 // pred_check
      _
    $region50: #{tpu_custom_call.1} parent=5 // pred_check_branch
      %278 = sbr.rel (%p275) target = $region52
    $region51: #{tpu_custom_call.1} parent=5 // pred_region
      %s279 = ssub.s32 %s14, 1
      %s280 = smul.u32 64, %s19
      %p281 = scmp.lt.s32.totalorder %s280, 127
      %s282 = scalar_select %p281, %s280, 127
      %s283 = smul.addr %s282, 8
      %s284 = scalar_lea.vmem %s0, %s283
      %p285 = pneg %p40
      %p286 = pneg %p37
      %s287 = smul.u32 64, %s19
      %p288 = scmp.lt.s32.totalorder %s287, 127
      %s289 = scalar_select %p288, %s287, 127
      %s290 = smul.addr %s289, 8
      %s291 = scalar_lea.vmem %s1, %s290
      %p292 = pneg %p66
      %p293 = pneg %p63
      %p294 = pneg %p87
      %p295 = pneg %p84
      %p296 = pneg %p108
      %p297 = pneg %p105
      %p298 = pneg %p129
      %p299 = pneg %p126
      %p300 = pneg %p150
      %p301 = pneg %p147
      %p302 = pneg %p171
      %p303 = pneg %p168
      %p304 = pneg %p192
      %p305 = pneg %p189
      %p306 = pneg %p218
      %p307 = pneg %p215
      %s308 = smul.u32 64, %s19
      %p309 = scmp.lt.s32.totalorder %s308, 127
      %s310 = scalar_select %p309, %s308, 127
      %s311 = smul.addr %s310, 8
      %s312 = scalar_lea.vmem %s8, %s311
      %s313 = smul.u32 64, %s19
      %p314 = scmp.lt.s32.totalorder %s313, 127
      %s315 = scalar_select %p314, %s313, 127
      %s316 = smul.addr %s315, 8
      %s317 = scalar_lea.vmem %s0, %s316
      %s318 = smul.u32 64, %s19
      %s319 = smul.u32 64, %s19
      %p320 = scmp.lt.s32.totalorder %s319, 127
      %s321 = scalar_select %p320, %s319, 127
      %s322 = smul.addr %s321, 8
      %s323 = scalar_lea.vmem %s1, %s322
      %s324 = smul.u32 64, %s19
      %s325 = smul.u32 64, %s19
      %p326 = scmp.lt.s32.totalorder %s325, 127
      %s327 = scalar_select %p326, %s325, 127
      %s328 = smul.addr %s327, 8
      %s329 = scalar_lea.vmem %s8, %s328
      %s330 = smul.u32 64, %s19
      %v331 = vld [vmem:[%s3] sm:$0x1]
      %v332 = vld [vmem:[%s2] sm:$0xff]
      %v333 = vld [vmem:[%s2 + $0x8] sm:$0xff]
      %v334 = vld [vmem:[%s317] sm:$0xff]
      %v335 = vld [vmem:[%s317 + $0x8] sm:$0xff]
      %v336 = vld [vmem:[%s317 + $0x10] sm:$0xff]
      %v337 = vld [vmem:[%s317 + $0x18] sm:$0xff]
      %v338 = vld [vmem:[%s317 + $0x20] sm:$0xff]
      %v339 = vld [vmem:[%s317 + $0x28] sm:$0xff]
      %v340 = vld [vmem:[%s317 + $0x30] sm:$0xff]
      %v341 = vld [vmem:[%s317 + $0x38] sm:$0xff]
      %v342 = vld [vmem:[%s317 + $0x40] sm:$0xff]
      %v343 = vld [vmem:[%s317 + $0x48] sm:$0xff]
      %v344 = vld [vmem:[%s317 + $0x50] sm:$0xff]
      %v345 = vld [vmem:[%s317 + $0x58] sm:$0xff]
      %v346 = vld [vmem:[%s317 + $0x60] sm:$0xff]
      %v347 = vld [vmem:[%s317 + $0x68] sm:$0xff]
      %v348 = vld [vmem:[%s317 + $0x70] sm:$0xff]
      %v349 = vld [vmem:[%s317 + $0x78] sm:$0xff]
      %v350 = vld [vmem:[%s317 + $0x80] sm:$0xff]
      %v351 = vld [vmem:[%s317 + $0x88] sm:$0xff]
      %v352 = vld [vmem:[%s317 + $0x90] sm:$0xff]
      %v353 = vld [vmem:[%s317 + $0x98] sm:$0xff]
      %v354 = vld [vmem:[%s317 + $0xa0] sm:$0xff]
      %v355 = vld [vmem:[%s317 + $0xa8] sm:$0xff]
      %v356 = vld [vmem:[%s317 + $0xb0] sm:$0xff]
      %v357 = vld [vmem:[%s317 + $0xb8] sm:$0xff]
      %v358 = vld [vmem:[%s317 + $0xc0] sm:$0xff]
      %v359 = vld [vmem:[%s317 + $0xc8] sm:$0xff]
      %v360 = vld [vmem:[%s317 + $0xd0] sm:$0xff]
      %v361 = vld [vmem:[%s317 + $0xd8] sm:$0xff]
      %v362 = vld [vmem:[%s317 + $0xe0] sm:$0xff]
      %v363 = vld [vmem:[%s317 + $0xe8] sm:$0xff]
      %v364 = vld [vmem:[%s317 + $0xf0] sm:$0xff]
      %v365 = vld [vmem:[%s317 + $0xf8] sm:$0xff]
      %v366 = vld [vmem:[%s317 + $0x100] sm:$0xff]
      %v367 = vld [vmem:[%s317 + $0x108] sm:$0xff]
      %v368 = vld [vmem:[%s317 + $0x110] sm:$0xff]
      %v369 = vld [vmem:[%s317 + $0x118] sm:$0xff]
      %v370 = vld [vmem:[%s317 + $0x120] sm:$0xff]
      %v371 = vld [vmem:[%s317 + $0x128] sm:$0xff]
      %v372 = vld [vmem:[%s317 + $0x130] sm:$0xff]
      %v373 = vld [vmem:[%s317 + $0x138] sm:$0xff]
      %v374 = vld [vmem:[%s317 + $0x140] sm:$0xff]
      %v375 = vld [vmem:[%s317 + $0x148] sm:$0xff]
      %v376 = vld [vmem:[%s317 + $0x150] sm:$0xff]
      %v377 = vld [vmem:[%s317 + $0x158] sm:$0xff]
      %v378 = vld [vmem:[%s317 + $0x160] sm:$0xff]
      %v379 = vld [vmem:[%s317 + $0x168] sm:$0xff]
      %v380 = vld [vmem:[%s317 + $0x170] sm:$0xff]
      %v381 = vld [vmem:[%s317 + $0x178] sm:$0xff]
      %v382 = vld [vmem:[%s317 + $0x180] sm:$0xff]
      %v383 = vld [vmem:[%s317 + $0x188] sm:$0xff]
      %v384 = vld [vmem:[%s317 + $0x190] sm:$0xff]
      %v385 = vld [vmem:[%s317 + $0x198] sm:$0xff]
      %v386 = vld [vmem:[%s317 + $0x1a0] sm:$0xff]
      %v387 = vld [vmem:[%s317 + $0x1a8] sm:$0xff]
      %v388 = vld [vmem:[%s317 + $0x1b0] sm:$0xff]
      %v389 = vld [vmem:[%s317 + $0x1b8] sm:$0xff]
      %v390 = vld [vmem:[%s317 + $0x1c0] sm:$0xff]
      %v391 = vld [vmem:[%s317 + $0x1c8] sm:$0xff]
      %v392 = vld [vmem:[%s317 + $0x1d0] sm:$0xff]
      %v393 = vld [vmem:[%s317 + $0x1d8] sm:$0xff]
      %v394 = vld [vmem:[%s317 + $0x1e0] sm:$0xff]
      %v395 = vld [vmem:[%s317 + $0x1e8] sm:$0xff]
      %v396 = vld [vmem:[%s317 + $0x1f0] sm:$0xff]
      %v397 = vld [vmem:[%s317 + $0x1f8] sm:$0xff]
      %vm398 = vcmask 130048
      %v400 = vsel %vm398, %v334, 0
      %v403 = vsel %vm398, %v335, 0
      %v406 = vsel %vm398, %v336, 0
      %v409 = vsel %vm398, %v337, 0
      %v412 = vsel %vm398, %v338, 0
      %v415 = vsel %vm398, %v339, 0
      %v418 = vsel %vm398, %v340, 0
      %v421 = vsel %vm398, %v341, 0
      %v424 = vsel %vm398, %v342, 0
      %v427 = vsel %vm398, %v343, 0
      %v430 = vsel %vm398, %v344, 0
      %v433 = vsel %vm398, %v345, 0
      %v436 = vsel %vm398, %v346, 0
      %v439 = vsel %vm398, %v347, 0
      %v442 = vsel %vm398, %v348, 0
      %v445 = vsel %vm398, %v349, 0
      %v448 = vsel %vm398, %v350, 0
      %v451 = vsel %vm398, %v351, 0
      %v454 = vsel %vm398, %v352, 0
      %v457 = vsel %vm398, %v353, 0
      %v460 = vsel %vm398, %v354, 0
      %v463 = vsel %vm398, %v355, 0
      %v466 = vsel %vm398, %v356, 0
      %v469 = vsel %vm398, %v357, 0
      %v472 = vsel %vm398, %v358, 0
      %v475 = vsel %vm398, %v359, 0
      %v478 = vsel %vm398, %v360, 0
      %v481 = vsel %vm398, %v361, 0
      %v484 = vsel %vm398, %v362, 0
      %v487 = vsel %vm398, %v363, 0
      %v490 = vsel %vm398, %v364, 0
      %v493 = vsel %vm398, %v365, 0
      %v496 = vsel %vm398, %v366, 0
      %v499 = vsel %vm398, %v367, 0
      %v502 = vsel %vm398, %v368, 0
      %v505 = vsel %vm398, %v369, 0
      %v508 = vsel %vm398, %v370, 0
      %v511 = vsel %vm398, %v371, 0
      %v514 = vsel %vm398, %v372, 0
      %v517 = vsel %vm398, %v373, 0
      %v520 = vsel %vm398, %v374, 0
      %v523 = vsel %vm398, %v375, 0
      %v526 = vsel %vm398, %v376, 0
      %v529 = vsel %vm398, %v377, 0
      %v532 = vsel %vm398, %v378, 0
      %v535 = vsel %vm398, %v379, 0
      %v538 = vsel %vm398, %v380, 0
      %v541 = vsel %vm398, %v381, 0
      %v544 = vsel %vm398, %v382, 0
      %v547 = vsel %vm398, %v383, 0
      %v550 = vsel %vm398, %v384, 0
      %v553 = vsel %vm398, %v385, 0
      %v556 = vsel %vm398, %v386, 0
      %v559 = vsel %vm398, %v387, 0
      %v562 = vsel %vm398, %v388, 0
      %v565 = vsel %vm398, %v389, 0
      %v568 = vsel %vm398, %v390, 0
      %v571 = vsel %vm398, %v391, 0
      %v574 = vsel %vm398, %v392, 0
      %v577 = vsel %vm398, %v393, 0
      %v580 = vsel %vm398, %v394, 0
      %v583 = vsel %vm398, %v395, 0
      %v586 = vsel %vm398, %v396, 0
      %v589 = vsel %vm398, %v397, 0
      %591 = vmatprep.subr.mxu0 0.0
      %592 = vmatpush1.msra.mxu0 %v332
      %593 = vmatprep.subr.mxu0 0.0
      %594 = vmatpush1.msra.mxu0 %v333
      %595 = vmatprep.subr.mxu0 0.0
      %596 = vmatpush1.msra.mxu0 0.0
      %597 = vmatprep.subr.mxu0 0.0
      %598 = vmatpush1.msra.mxu0 0.0
      %599 = vmatprep.subr.mxu0 0.0
      %600 = vmatpush1.msra.mxu0 0.0
      %601 = vmatprep.subr.mxu0 0.0
      %602 = vmatpush1.msra.mxu0 0.0
      %603 = vmatprep.subr.mxu0 0.0
      %604 = vmatpush1.msra.mxu0 0.0
      %605 = vmatprep.subr.mxu0 0.0
      %606 = vmatpush1.msra.mxu0 0.0
      %607 = vmatprep.subr.mxu0 0.0
      %608 = vmatpush1.msra.mxu0 0.0
      %609 = vmatprep.subr.mxu0 0.0
      %610 = vmatpush1.msra.mxu0 0.0
      %611 = vmatprep.subr.mxu0 0.0
      %612 = vmatpush1.msra.mxu0 0.0
      %613 = vmatprep.subr.mxu0 0.0
      %614 = vmatpush1.msra.mxu0 0.0
      %615 = vmatprep.subr.mxu0 0.0
      %616 = vmatpush1.msra.mxu0 0.0
      %617 = vmatprep.subr.mxu0 0.0
      %618 = vmatpush1.msra.mxu0 0.0
      %619 = vmatprep.subr.mxu0 0.0
      %620 = vmatpush1.msra.mxu0 0.0
      %621 = vmatprep.subr.mxu0 0.0
      %622 = vmatpush1.msra.mxu0 0.0
      %623 = vmatprep.subr.mxu0 0.0
      %624 = vmatpush1.msra.mxu0 0.0
      %625 = vmatprep.subr.mxu0 0.0
      %626 = vmatpush1.msra.mxu0 0.0
      %627 = vmatprep.subr.mxu0 0.0
      %628 = vmatpush1.msra.mxu0 0.0
      %629 = vmatprep.subr.mxu0 0.0
      %630 = vmatpush1.msra.mxu0 0.0
      %631 = vmatprep.subr.mxu0 0.0
      %632 = vmatpush1.msra.mxu0 0.0
      %633 = vmatprep.subr.mxu0 0.0
      %634 = vmatpush1.msra.mxu0 0.0
      %635 = vmatprep.subr.mxu0 0.0
      %636 = vmatpush1.msra.mxu0 0.0
      %637 = vmatprep.subr.mxu0 0.0
      %638 = vmatpush1.msra.mxu0 0.0
      %639 = vmatprep.subr.mxu0 0.0
      %640 = vmatpush1.msra.mxu0 0.0
      %641 = vmatprep.subr.mxu0 0.0
      %642 = vmatpush1.msra.mxu0 0.0
      %643 = vmatprep.subr.mxu0 0.0
      %644 = vmatpush1.msra.mxu0 0.0
      %645 = vmatprep.subr.mxu0 0.0
      %646 = vmatpush1.msra.mxu0 0.0
      %647 = vmatprep.subr.mxu0 0.0
      %648 = vmatpush1.msra.mxu0 0.0
      %649 = vmatprep.subr.mxu0 0.0
      %650 = vmatpush1.msra.mxu0 0.0
      %651 = vmatprep.subr.mxu0 0.0
      %652 = vmatpush1.msra.mxu0 0.0
      %653 = vmatprep.subr.mxu0 0.0
      %654 = vmatpush1.msra.mxu0 0.0
      %655 = vmatprep.mubr.f32.mxu0 0.0
      %656 = vmatmul.mubr.f32.gmra.mrb[0].mxu0 %v400
      %v657 = vpop.f32.mrb[0].mxu0
      %v658 = vadd.f32 0.0, %v657
      %v659 = vpop.f32.mrb[0].mxu0
      %660 = vmatprep.mubr.f32.mxu0 0.0
      %661 = vmatmul.mubr.f32.gmra.mrb[0].mxu0 %v403
      %v662 = vpop.f32.mrb[0].mxu0
      %v663 = vadd.f32 0.0, %v662
      %v664 = vpop.f32.mrb[0].mxu0
      %665 = vmatprep.mubr.f32.mxu0 0.0
      %666 = vmatmul.mubr.f32.gmra.mrb[0].mxu0 %v406
      %v667 = vpop.f32.mrb[0].mxu0
      %v668 = vadd.f32 0.0, %v667
      %v669 = vpop.f32.mrb[0].mxu0
      %670 = vmatprep.mubr.f32.mxu0 0.0
      %671 = vmatmul.mubr.f32.gmra.mrb[0].mxu0 %v409
      %v672 = vpop.f32.mrb[0].mxu0
      %v673 = vadd.f32 0.0, %v672
      %v674 = vpop.f32.mrb[0].mxu0
      %675 = vmatprep.mubr.f32.mxu0 0.0
      %676 = vmatmul.mubr.f32.gmra.mrb[0].mxu0 %v412
      %v677 = vpop.f32.mrb[0].mxu0
      %v678 = vadd.f32 0.0, %v677
      %v679 = vpop.f32.mrb[0].mxu0
      %680 = vmatprep.mubr.f32.mxu0 0.0
      %681 = vmatmul.mubr.f32.gmra.mrb[0].mxu0 %v415
      %v682 = vpop.f32.mrb[0].mxu0
      %v683 = vadd.f32 0.0, %v682
      %v684 = vpop.f32.mrb[0].mxu0
      %685 = vmatprep.mubr.f32.mxu0 0.0
      %686 = vmatmul.mubr.f32.gmra.mrb[0].mxu0 %v418
      %v687 = vpop.f32.mrb[0].mxu0
      %v688 = vadd.f32 0.0, %v687
      %v689 = vpop.f32.mrb[0].mxu0
      %690 = vmatprep.mubr.f32.mxu0 0.0
      %691 = vmatmul.mubr.f32.gmra.mrb[0].mxu0 %v421
      %v692 = vpop.f32.mrb[0].mxu0
      %v693 = vadd.f32 0.0, %v692
      %v694 = vpop.f32.mrb[0].mxu0
      %695 = vmatprep.mubr.f32.mxu0 0.0
      %696 = vmatmul.mubr.f32.gmra.mrb[0].mxu0 %v424
      %v697 = vpop.f32.mrb[0].mxu0
      %v698 = vadd.f32 0.0, %v697
      %v699 = vpop.f32.mrb[0].mxu0
      %700 = vmatprep.mubr.f32.mxu0 0.0
      %701 = vmatmul.mubr.f32.gmra.mrb[0].mxu0 %v427
      %v702 = vpop.f32.mrb[0].mxu0
      %v703 = vadd.f32 0.0, %v702
      %v704 = vpop.f32.mrb[0].mxu0
      %705 = vmatprep.mubr.f32.mxu0 0.0
      %706 = vmatmul.mubr.f32.gmra.mrb[0].mxu0 %v430
      %v707 = vpop.f32.mrb[0].mxu0
      %v708 = vadd.f32 0.0, %v707
      %v709 = vpop.f32.mrb[0].mxu0
      %710 = vmatprep.mubr.f32.mxu0 0.0
      %711 = vmatmul.mubr.f32.gmra.mrb[0].mxu0 %v433
      %v712 = vpop.f32.mrb[0].mxu0
      %v713 = vadd.f32 0.0, %v712
      %v714 = vpop.f32.mrb[0].mxu0
      %715 = vmatprep.mubr.f32.mxu0 0.0
      %716 = vmatmul.mubr.f32.gmra.mrb[0].mxu0 %v436
      %v717 = vpop.f32.mrb[0].mxu0
      %v718 = vadd.f32 0.0, %v717
      %v719 = vpop.f32.mrb[0].mxu0
      %720 = vmatprep.mubr.f32.mxu0 0.0
      %721 = vmatmul.mubr.f32.gmra.mrb[0].mxu0 %v439
      %v722 = vpop.f32.mrb[0].mxu0
      %v723 = vadd.f32 0.0, %v722
      %v724 = vpop.f32.mrb[0].mxu0
      %725 = vmatprep.mubr.f32.mxu0 0.0
      %726 = vmatmul.mubr.f32.gmra.mrb[0].mxu0 %v442
      %v727 = vpop.f32.mrb[0].mxu0
      %v728 = vadd.f32 0.0, %v727
      %v729 = vpop.f32.mrb[0].mxu0
      %730 = vmatprep.mubr.f32.mxu0 0.0
      %731 = vmatmul.mubr.f32.gmra.mrb[0].mxu0 %v445
      %v732 = vpop.f32.mrb[0].mxu0
      %v733 = vadd.f32 0.0, %v732
      %v734 = vpop.f32.mrb[0].mxu0
      %735 = vmatprep.mubr.f32.mxu0 0.0
      %736 = vmatmul.mubr.f32.gmra.mrb[0].mxu0 %v448
      %v737 = vpop.f32.mrb[0].mxu0
      %v738 = vadd.f32 0.0, %v737
      %v739 = vpop.f32.mrb[0].mxu0
      %740 = vmatprep.mubr.f32.mxu0 0.0
      %741 = vmatmul.mubr.f32.gmra.mrb[0].mxu0 %v451
      %v742 = vpop.f32.mrb[0].mxu0
      %v743 = vadd.f32 0.0, %v742
      %v744 = vpop.f32.mrb[0].mxu0
      %745 = vmatprep.mubr.f32.mxu0 0.0
      %746 = vmatmul.mubr.f32.gmra.mrb[0].mxu0 %v454
      %v747 = vpop.f32.mrb[0].mxu0
      %v748 = vadd.f32 0.0, %v747
      %v749 = vpop.f32.mrb[0].mxu0
      %750 = vmatprep.mubr.f32.mxu0 0.0
      %751 = vmatmul.mubr.f32.gmra.mrb[0].mxu0 %v457
      %v752 = vpop.f32.mrb[0].mxu0
      %v753 = vadd.f32 0.0, %v752
      %v754 = vpop.f32.mrb[0].mxu0
      %755 = vmatprep.mubr.f32.mxu0 0.0
      %756 = vmatmul.mubr.f32.gmra.mrb[0].mxu0 %v460
      %v757 = vpop.f32.mrb[0].mxu0
      %v758 = vadd.f32 0.0, %v757
      %v759 = vpop.f32.mrb[0].mxu0
      %760 = vmatprep.mubr.f32.mxu0 0.0
      %761 = vmatmul.mubr.f32.gmra.mrb[0].mxu0 %v463
      %v762 = vpop.f32.mrb[0].mxu0
      %v763 = vadd.f32 0.0, %v762
      %v764 = vpop.f32.mrb[0].mxu0
      %765 = vmatprep.mubr.f32.mxu0 0.0
      %766 = vmatmul.mubr.f32.gmra.mrb[0].mxu0 %v466
      %v767 = vpop.f32.mrb[0].mxu0
      %v768 = vadd.f32 0.0, %v767
      %v769 = vpop.f32.mrb[0].mxu0
      %770 = vmatprep.mubr.f32.mxu0 0.0
      %771 = vmatmul.mubr.f32.gmra.mrb[0].mxu0 %v469
      %v772 = vpop.f32.mrb[0].mxu0
      %v773 = vadd.f32 0.0, %v772
      %v774 = vpop.f32.mrb[0].mxu0
      %775 = vmatprep.mubr.f32.mxu0 0.0
      %776 = vmatmul.mubr.f32.gmra.mrb[0].mxu0 %v472
      %v777 = vpop.f32.mrb[0].mxu0
      %v778 = vadd.f32 0.0, %v777
      %v779 = vpop.f32.mrb[0].mxu0
      %780 = vmatprep.mubr.f32.mxu0 0.0
      %781 = vmatmul.mubr.f32.gmra.mrb[0].mxu0 %v475
      %v782 = vpop.f32.mrb[0].mxu0
      %v783 = vadd.f32 0.0, %v782
      %v784 = vpop.f32.mrb[0].mxu0
      %785 = vmatprep.mubr.f32.mxu0 0.0
      %786 = vmatmul.mubr.f32.gmra.mrb[0].mxu0 %v478
      %v787 = vpop.f32.mrb[0].mxu0
      %v788 = vadd.f32 0.0, %v787
      %v789 = vpop.f32.mrb[0].mxu0
      %790 = vmatprep.mubr.f32.mxu0 0.0
      %791 = vmatmul.mubr.f32.gmra.mrb[0].mxu0 %v481
      %v792 = vpop.f32.mrb[0].mxu0
      %v793 = vadd.f32 0.0, %v792
      %v794 = vpop.f32.mrb[0].mxu0
      %795 = vmatprep.mubr.f32.mxu0 0.0
      %796 = vmatmul.mubr.f32.gmra.mrb[0].mxu0 %v484
      %v797 = vpop.f32.mrb[0].mxu0
      %v798 = vadd.f32 0.0, %v797
      %v799 = vpop.f32.mrb[0].mxu0
      %800 = vmatprep.mubr.f32.mxu0 0.0
      %801 = vmatmul.mubr.f32.gmra.mrb[0].mxu0 %v487
      %v802 = vpop.f32.mrb[0].mxu0
      %v803 = vadd.f32 0.0, %v802
      %v804 = vpop.f32.mrb[0].mxu0
      %805 = vmatprep.mubr.f32.mxu0 0.0
      %806 = vmatmul.mubr.f32.gmra.mrb[0].mxu0 %v490
      %v807 = vpop.f32.mrb[0].mxu0
      %v808 = vadd.f32 0.0, %v807
      %v809 = vpop.f32.mrb[0].mxu0
      %810 = vmatprep.mubr.f32.mxu0 0.0
      %811 = vmatmul.mubr.f32.gmra.mrb[0].mxu0 %v493
      %v812 = vpop.f32.mrb[0].mxu0
      %v813 = vadd.f32 0.0, %v812
      %v814 = vpop.f32.mrb[0].mxu0
      %815 = vmatprep.mubr.f32.mxu0 0.0
      %816 = vmatmul.mubr.f32.gmra.mrb[0].mxu0 %v496
      %v817 = vpop.f32.mrb[0].mxu0
      %v818 = vadd.f32 0.0, %v817
      %v819 = vpop.f32.mrb[0].mxu0
      %820 = vmatprep.mubr.f32.mxu0 0.0
      %821 = vmatmul.mubr.f32.gmra.mrb[0].mxu0 %v499
      %v822 = vpop.f32.mrb[0].mxu0
      %v823 = vadd.f32 0.0, %v822
      %v824 = vpop.f32.mrb[0].mxu0
      %825 = vmatprep.mubr.f32.mxu0 0.0
      %826 = vmatmul.mubr.f32.gmra.mrb[0].mxu0 %v502
      %v827 = vpop.f32.mrb[0].mxu0
      %v828 = vadd.f32 0.0, %v827
      %v829 = vpop.f32.mrb[0].mxu0
      %830 = vmatprep.mubr.f32.mxu0 0.0
      %831 = vmatmul.mubr.f32.gmra.mrb[0].mxu0 %v505
      %v832 = vpop.f32.mrb[0].mxu0
      %v833 = vadd.f32 0.0, %v832
      %v834 = vpop.f32.mrb[0].mxu0
      %835 = vmatprep.mubr.f32.mxu0 0.0
      %836 = vmatmul.mubr.f32.gmra.mrb[0].mxu0 %v508
      %v837 = vpop.f32.mrb[0].mxu0
      %v838 = vadd.f32 0.0, %v837
      %v839 = vpop.f32.mrb[0].mxu0
      %840 = vmatprep.mubr.f32.mxu0 0.0
      %841 = vmatmul.mubr.f32.gmra.mrb[0].mxu0 %v511
      %v842 = vpop.f32.mrb[0].mxu0
      %v843 = vadd.f32 0.0, %v842
      %v844 = vpop.f32.mrb[0].mxu0
      %845 = vmatprep.mubr.f32.mxu0 0.0
      %846 = vmatmul.mubr.f32.gmra.mrb[0].mxu0 %v514
      %v847 = vpop.f32.mrb[0].mxu0
      %v848 = vadd.f32 0.0, %v847
      %v849 = vpop.f32.mrb[0].mxu0
      %850 = vmatprep.mubr.f32.mxu0 0.0
      %851 = vmatmul.mubr.f32.gmra.mrb[0].mxu0 %v517
      %v852 = vpop.f32.mrb[0].mxu0
      %v853 = vadd.f32 0.0, %v852
      %v854 = vpop.f32.mrb[0].mxu0
      %855 = vmatprep.mubr.f32.mxu0 0.0
      %856 = vmatmul.mubr.f32.gmra.mrb[0].mxu0 %v520
      %v857 = vpop.f32.mrb[0].mxu0
      %v858 = vadd.f32 0.0, %v857
      %v859 = vpop.f32.mrb[0].mxu0
      %860 = vmatprep.mubr.f32.mxu0 0.0
      %861 = vmatmul.mubr.f32.gmra.mrb[0].mxu0 %v523
      %v862 = vpop.f32.mrb[0].mxu0
      %v863 = vadd.f32 0.0, %v862
      %v864 = vpop.f32.mrb[0].mxu0
      %865 = vmatprep.mubr.f32.mxu0 0.0
      %866 = vmatmul.mubr.f32.gmra.mrb[0].mxu0 %v526
      %v867 = vpop.f32.mrb[0].mxu0
      %v868 = vadd.f32 0.0, %v867
      %v869 = vpop.f32.mrb[0].mxu0
      %870 = vmatprep.mubr.f32.mxu0 0.0
      %871 = vmatmul.mubr.f32.gmra.mrb[0].mxu0 %v529
      %v872 = vpop.f32.mrb[0].mxu0
      %v873 = vadd.f32 0.0, %v872
      %v874 = vpop.f32.mrb[0].mxu0
      %875 = vmatprep.mubr.f32.mxu0 0.0
      %876 = vmatmul.mubr.f32.gmra.mrb[0].mxu0 %v532
      %v877 = vpop.f32.mrb[0].mxu0
      %v878 = vadd.f32 0.0, %v877
      %v879 = vpop.f32.mrb[0].mxu0
      %880 = vmatprep.mubr.f32.mxu0 0.0
      %881 = vmatmul.mubr.f32.gmra.mrb[0].mxu0 %v535
      %v882 = vpop.f32.mrb[0].mxu0
      %v883 = vadd.f32 0.0, %v882
      %v884 = vpop.f32.mrb[0].mxu0
      %885 = vmatprep.mubr.f32.mxu0 0.0
      %886 = vmatmul.mubr.f32.gmra.mrb[0].mxu0 %v538
      %v887 = vpop.f32.mrb[0].mxu0
      %v888 = vadd.f32 0.0, %v887
      %v889 = vpop.f32.mrb[0].mxu0
      %890 = vmatprep.mubr.f32.mxu0 0.0
      %891 = vmatmul.mubr.f32.gmra.mrb[0].mxu0 %v541
      %v892 = vpop.f32.mrb[0].mxu0
      %v893 = vadd.f32 0.0, %v892
      %v894 = vpop.f32.mrb[0].mxu0
      %895 = vmatprep.mubr.f32.mxu0 0.0
      %896 = vmatmul.mubr.f32.gmra.mrb[0].mxu0 %v544
      %v897 = vpop.f32.mrb[0].mxu0
      %v898 = vadd.f32 0.0, %v897
      %v899 = vpop.f32.mrb[0].mxu0
      %900 = vmatprep.mubr.f32.mxu0 0.0
      %901 = vmatmul.mubr.f32.gmra.mrb[0].mxu0 %v547
      %v902 = vpop.f32.mrb[0].mxu0
      %v903 = vadd.f32 0.0, %v902
      %v904 = vpop.f32.mrb[0].mxu0
      %905 = vmatprep.mubr.f32.mxu0 0.0
      %906 = vmatmul.mubr.f32.gmra.mrb[0].mxu0 %v550
      %v907 = vpop.f32.mrb[0].mxu0
      %v908 = vadd.f32 0.0, %v907
      %v909 = vpop.f32.mrb[0].mxu0
      %910 = vmatprep.mubr.f32.mxu0 0.0
      %911 = vmatmul.mubr.f32.gmra.mrb[0].mxu0 %v553
      %v912 = vpop.f32.mrb[0].mxu0
      %v913 = vadd.f32 0.0, %v912
      %v914 = vpop.f32.mrb[0].mxu0
      %915 = vmatprep.mubr.f32.mxu0 0.0
      %916 = vmatmul.mubr.f32.gmra.mrb[0].mxu0 %v556
      %v917 = vpop.f32.mrb[0].mxu0
      %v918 = vadd.f32 0.0, %v917
      %v919 = vpop.f32.mrb[0].mxu0
      %920 = vmatprep.mubr.f32.mxu0 0.0
      %921 = vmatmul.mubr.f32.gmra.mrb[0].mxu0 %v559
      %v922 = vpop.f32.mrb[0].mxu0
      %v923 = vadd.f32 0.0, %v922
      %v924 = vpop.f32.mrb[0].mxu0
      %925 = vmatprep.mubr.f32.mxu0 0.0
      %926 = vmatmul.mubr.f32.gmra.mrb[0].mxu0 %v562
      %v927 = vpop.f32.mrb[0].mxu0
      %v928 = vadd.f32 0.0, %v927
      %v929 = vpop.f32.mrb[0].mxu0
      %930 = vmatprep.mubr.f32.mxu0 0.0
      %931 = vmatmul.mubr.f32.gmra.mrb[0].mxu0 %v565
      %v932 = vpop.f32.mrb[0].mxu0
      %v933 = vadd.f32 0.0, %v932
      %v934 = vpop.f32.mrb[0].mxu0
      %935 = vmatprep.mubr.f32.mxu0 0.0
      %936 = vmatmul.mubr.f32.gmra.mrb[0].mxu0 %v568
      %v937 = vpop.f32.mrb[0].mxu0
      %v938 = vadd.f32 0.0, %v937
      %v939 = vpop.f32.mrb[0].mxu0
      %940 = vmatprep.mubr.f32.mxu0 0.0
      %941 = vmatmul.mubr.f32.gmra.mrb[0].mxu0 %v571
      %v942 = vpop.f32.mrb[0].mxu0
      %v943 = vadd.f32 0.0, %v942
      %v944 = vpop.f32.mrb[0].mxu0
      %945 = vmatprep.mubr.f32.mxu0 0.0
      %946 = vmatmul.mubr.f32.gmra.mrb[0].mxu0 %v574
      %v947 = vpop.f32.mrb[0].mxu0
      %v948 = vadd.f32 0.0, %v947
      %v949 = vpop.f32.mrb[0].mxu0
      %950 = vmatprep.mubr.f32.mxu0 0.0
      %951 = vmatmul.mubr.f32.gmra.mrb[0].mxu0 %v577
      %v952 = vpop.f32.mrb[0].mxu0
      %v953 = vadd.f32 0.0, %v952
      %v954 = vpop.f32.mrb[0].mxu0
      %955 = vmatprep.mubr.f32.mxu0 0.0
      %956 = vmatmul.mubr.f32.gmra.mrb[0].mxu0 %v580
      %v957 = vpop.f32.mrb[0].mxu0
      %v958 = vadd.f32 0.0, %v957
      %v959 = vpop.f32.mrb[0].mxu0
      %960 = vmatprep.mubr.f32.mxu0 0.0
      %961 = vmatmul.mubr.f32.gmra.mrb[0].mxu0 %v583
      %v962 = vpop.f32.mrb[0].mxu0
      %v963 = vadd.f32 0.0, %v962
      %v964 = vpop.f32.mrb[0].mxu0
      %965 = vmatprep.mubr.f32.mxu0 0.0
      %966 = vmatmul.mubr.f32.gmra.mrb[0].mxu0 %v586
      %v967 = vpop.f32.mrb[0].mxu0
      %v968 = vadd.f32 0.0, %v967
      %v969 = vpop.f32.mrb[0].mxu0
      %970 = vmatprep.mubr.f32.mxu0 0.0
      %971 = vmatmul.mubr.f32.gmra.mrb[0].mxu0 %v589
      %v972 = vpop.f32.mrb[0].mxu0
      %v973 = vadd.f32 0.0, %v972
      %v974 = vpop.f32.mrb[0].mxu0
      %975 = vdwg.mxu0
      %v977 = vlaneseq
      %v978 = vshrl.u32 %v977, 7
      %v979 = vsub.s32 0, %v978
      %v980 = vrot.slane %v331, %v979
      %v982 = vadd.f32 %v980, %v658
      %v983 = vadd.f32 %v980, %v663
      %v984 = vadd.f32 %v980, %v668
      %v985 = vadd.f32 %v980, %v673
      %v986 = vadd.f32 %v980, %v678
      %v987 = vadd.f32 %v980, %v683
      %v988 = vadd.f32 %v980, %v688
      %v989 = vadd.f32 %v980, %v693
      %v990 = vadd.f32 %v980, %v698
      %v991 = vadd.f32 %v980, %v703
      %v992 = vadd.f32 %v980, %v708
      %v993 = vadd.f32 %v980, %v713
      %v994 = vadd.f32 %v980, %v718
      %v995 = vadd.f32 %v980, %v723
      %v996 = vadd.f32 %v980, %v728
      %v997 = vadd.f32 %v980, %v733
      %v998 = vadd.f32 %v980, %v738
      %v999 = vadd.f32 %v980, %v743
      %v1000 = vadd.f32 %v980, %v748
      %v1001 = vadd.f32 %v980, %v753
      %v1002 = vadd.f32 %v980, %v758
      %v1003 = vadd.f32 %v980, %v763
      %v1004 = vadd.f32 %v980, %v768
      %v1005 = vadd.f32 %v980, %v773
      %v1006 = vadd.f32 %v980, %v778
      %v1007 = vadd.f32 %v980, %v783
      %v1008 = vadd.f32 %v980, %v788
      %v1009 = vadd.f32 %v980, %v793
      %v1010 = vadd.f32 %v980, %v798
      %v1011 = vadd.f32 %v980, %v803
      %v1012 = vadd.f32 %v980, %v808
      %v1013 = vadd.f32 %v980, %v813
      %v1014 = vadd.f32 %v980, %v818
      %v1015 = vadd.f32 %v980, %v823
      %v1016 = vadd.f32 %v980, %v828
      %v1017 = vadd.f32 %v980, %v833
      %v1018 = vadd.f32 %v980, %v838
      %v1019 = vadd.f32 %v980, %v843
      %v1020 = vadd.f32 %v980, %v848
      %v1021 = vadd.f32 %v980, %v853
      %v1022 = vadd.f32 %v980, %v858
      %v1023 = vadd.f32 %v980, %v863
      %v1024 = vadd.f32 %v980, %v868
      %v1025 = vadd.f32 %v980, %v873
      %v1026 = vadd.f32 %v980, %v878
      %v1027 = vadd.f32 %v980, %v883
      %v1028 = vadd.f32 %v980, %v888
      %v1029 = vadd.f32 %v980, %v893
      %v1030 = vadd.f32 %v980, %v898
      %v1031 = vadd.f32 %v980, %v903
      %v1032 = vadd.f32 %v980, %v908
      %v1033 = vadd.f32 %v980, %v913
      %v1034 = vadd.f32 %v980, %v918
      %v1035 = vadd.f32 %v980, %v923
      %v1036 = vadd.f32 %v980, %v928
      %v1037 = vadd.f32 %v980, %v933
      %v1038 = vadd.f32 %v980, %v938
      %v1039 = vadd.f32 %v980, %v943
      %v1040 = vadd.f32 %v980, %v948
      %v1041 = vadd.f32 %v980, %v953
      %v1042 = vadd.f32 %v980, %v958
      %v1043 = vadd.f32 %v980, %v963
      %v1044 = vadd.f32 %v980, %v968
      %v1045 = vadd.f32 %v980, %v973
      %v1046 = vld [vmem:[%s2 + $0x10] sm:$0xff]
      %v1047 = vld [vmem:[%s2 + $0x18] sm:$0xff]
      %v1048 = vld [vmem:[%s323] sm:$0xff]
      %v1049 = vld [vmem:[%s323 + $0x8] sm:$0xff]
      %v1050 = vld [vmem:[%s323 + $0x10] sm:$0xff]
      %v1051 = vld [vmem:[%s323 + $0x18] sm:$0xff]
      %v1052 = vld [vmem:[%s323 + $0x20] sm:$0xff]
      %v1053 = vld [vmem:[%s323 + $0x28] sm:$0xff]
      %v1054 = vld [vmem:[%s323 + $0x30] sm:$0xff]
      %v1055 = vld [vmem:[%s323 + $0x38] sm:$0xff]
      %v1056 = vld [vmem:[%s323 + $0x40] sm:$0xff]
      %v1057 = vld [vmem:[%s323 + $0x48] sm:$0xff]
      %v1058 = vld [vmem:[%s323 + $0x50] sm:$0xff]
      %v1059 = vld [vmem:[%s323 + $0x58] sm:$0xff]
      %v1060 = vld [vmem:[%s323 + $0x60] sm:$0xff]
      %v1061 = vld [vmem:[%s323 + $0x68] sm:$0xff]
      %v1062 = vld [vmem:[%s323 + $0x70] sm:$0xff]
      %v1063 = vld [vmem:[%s323 + $0x78] sm:$0xff]
      %v1064 = vld [vmem:[%s323 + $0x80] sm:$0xff]
      %v1065 = vld [vmem:[%s323 + $0x88] sm:$0xff]
      %v1066 = vld [vmem:[%s323 + $0x90] sm:$0xff]
      %v1067 = vld [vmem:[%s323 + $0x98] sm:$0xff]
      %v1068 = vld [vmem:[%s323 + $0xa0] sm:$0xff]
      %v1069 = vld [vmem:[%s323 + $0xa8] sm:$0xff]
      %v1070 = vld [vmem:[%s323 + $0xb0] sm:$0xff]
      %v1071 = vld [vmem:[%s323 + $0xb8] sm:$0xff]
      %v1072 = vld [vmem:[%s323 + $0xc0] sm:$0xff]
      %v1073 = vld [vmem:[%s323 + $0xc8] sm:$0xff]
      %v1074 = vld [vmem:[%s323 + $0xd0] sm:$0xff]
      %v1075 = vld [vmem:[%s323 + $0xd8] sm:$0xff]
      %v1076 = vld [vmem:[%s323 + $0xe0] sm:$0xff]
      %v1077 = vld [vmem:[%s323 + $0xe8] sm:$0xff]
      %v1078 = vld [vmem:[%s323 + $0xf0] sm:$0xff]
      %v1079 = vld [vmem:[%s323 + $0xf8] sm:$0xff]
      %v1080 = vld [vmem:[%s323 + $0x100] sm:$0xff]
      %v1081 = vld [vmem:[%s323 + $0x108] sm:$0xff]
      %v1082 = vld [vmem:[%s323 + $0x110] sm:$0xff]
      %v1083 = vld [vmem:[%s323 + $0x118] sm:$0xff]
      %v1084 = vld [vmem:[%s323 + $0x120] sm:$0xff]
      %v1085 = vld [vmem:[%s323 + $0x128] sm:$0xff]
      %v1086 = vld [vmem:[%s323 + $0x130] sm:$0xff]
      %v1087 = vld [vmem:[%s323 + $0x138] sm:$0xff]
      %v1088 = vld [vmem:[%s323 + $0x140] sm:$0xff]
      %v1089 = vld [vmem:[%s323 + $0x148] sm:$0xff]
      %v1090 = vld [vmem:[%s323 + $0x150] sm:$0xff]
      %v1091 = vld [vmem:[%s323 + $0x158] sm:$0xff]
      %v1092 = vld [vmem:[%s323 + $0x160] sm:$0xff]
      %v1093 = vld [vmem:[%s323 + $0x168] sm:$0xff]
      %v1094 = vld [vmem:[%s323 + $0x170] sm:$0xff]
      %v1095 = vld [vmem:[%s323 + $0x178] sm:$0xff]
      %v1096 = vld [vmem:[%s323 + $0x180] sm:$0xff]
      %v1097 = vld [vmem:[%s323 + $0x188] sm:$0xff]
      %v1098 = vld [vmem:[%s323 + $0x190] sm:$0xff]
      %v1099 = vld [vmem:[%s323 + $0x198] sm:$0xff]
      %v1100 = vld [vmem:[%s323 + $0x1a0] sm:$0xff]
      %v1101 = vld [vmem:[%s323 + $0x1a8] sm:$0xff]
      %v1102 = vld [vmem:[%s323 + $0x1b0] sm:$0xff]
      %v1103 = vld [vmem:[%s323 + $0x1b8] sm:$0xff]
      %v1104 = vld [vmem:[%s323 + $0x1c0] sm:$0xff]
      %v1105 = vld [vmem:[%s323 + $0x1c8] sm:$0xff]
      %v1106 = vld [vmem:[%s323 + $0x1d0] sm:$0xff]
      %v1107 = vld [vmem:[%s323 + $0x1d8] sm:$0xff]
      %v1108 = vld [vmem:[%s323 + $0x1e0] sm:$0xff]
      %v1109 = vld [vmem:[%s323 + $0x1e8] sm:$0xff]
      %v1110 = vld [vmem:[%s323 + $0x1f0] sm:$0xff]
      %v1111 = vld [vmem:[%s323 + $0x1f8] sm:$0xff]
      %v1113 = vsel %vm398, %v1048, 0
      %v1116 = vsel %vm398, %v1049, 0
      %v1119 = vsel %vm398, %v1050, 0
      %v1122 = vsel %vm398, %v1051, 0
      %v1125 = vsel %vm398, %v1052, 0
      %v1128 = vsel %vm398, %v1053, 0
      %v1131 = vsel %vm398, %v1054, 0
      %v1134 = vsel %vm398, %v1055, 0
      %v1137 = vsel %vm398, %v1056, 0
      %v1140 = vsel %vm398, %v1057, 0
      %v1143 = vsel %vm398, %v1058, 0
      %v1146 = vsel %vm398, %v1059, 0
      %v1149 = vsel %vm398, %v1060, 0
      %v1152 = vsel %vm398, %v1061, 0
      %v1155 = vsel %vm398, %v1062, 0
      %v1158 = vsel %vm398, %v1063, 0
      %v1161 = vsel %vm398, %v1064, 0
      %v1164 = vsel %vm398, %v1065, 0
      %v1167 = vsel %vm398, %v1066, 0
      %v1170 = vsel %vm398, %v1067, 0
      %v1173 = vsel %vm398, %v1068, 0
      %v1176 = vsel %vm398, %v1069, 0
      %v1179 = vsel %vm398, %v1070, 0
      %v1182 = vsel %vm398, %v1071, 0
      %v1185 = vsel %vm398, %v1072, 0
      %v1188 = vsel %vm398, %v1073, 0
      %v1191 = vsel %vm398, %v1074, 0
      %v1194 = vsel %vm398, %v1075, 0
      %v1197 = vsel %vm398, %v1076, 0
      %v1200 = vsel %vm398, %v1077, 0
      %v1203 = vsel %vm398, %v1078, 0
      %v1206 = vsel %vm398, %v1079, 0
      %v1209 = vsel %vm398, %v1080, 0
      %v1212 = vsel %vm398, %v1081, 0
      %v1215 = vsel %vm398, %v1082, 0
      %v1218 = vsel %vm398, %v1083, 0
      %v1221 = vsel %vm398, %v1084, 0
      %v1224 = vsel %vm398, %v1085, 0
      %v1227 = vsel %vm398, %v1086, 0
      %v1230 = vsel %vm398, %v1087, 0
      %v1233 = vsel %vm398, %v1088, 0
      %v1236 = vsel %vm398, %v1089, 0
      %v1239 = vsel %vm398, %v1090, 0
      %v1242 = vsel %vm398, %v1091, 0
      %v1245 = vsel %vm398, %v1092, 0
      %v1248 = vsel %vm398, %v1093, 0
      %v1251 = vsel %vm398, %v1094, 0
      %v1254 = vsel %vm398, %v1095, 0
      %v1257 = vsel %vm398, %v1096, 0
      %v1260 = vsel %vm398, %v1097, 0
      %v1263 = vsel %vm398, %v1098, 0
      %v1266 = vsel %vm398, %v1099, 0
      %v1269 = vsel %vm398, %v1100, 0
      %v1272 = vsel %vm398, %v1101, 0
      %v1275 = vsel %vm398, %v1102, 0
      %v1278 = vsel %vm398, %v1103, 0
      %v1281 = vsel %vm398, %v1104, 0
      %v1284 = vsel %vm398, %v1105, 0
      %v1287 = vsel %vm398, %v1106, 0
      %v1290 = vsel %vm398, %v1107, 0
      %v1293 = vsel %vm398, %v1108, 0
      %v1296 = vsel %vm398, %v1109, 0
      %v1299 = vsel %vm398, %v1110, 0
      %v1302 = vsel %vm398, %v1111, 0
      %1304 = vmatprep.subr.mxu0 0.0
      %1305 = vmatpush1.msra.mxu0 %v1046
      %1306 = vmatprep.subr.mxu0 0.0
      %1307 = vmatpush1.msra.mxu0 %v1047
      %1308 = vmatprep.subr.mxu0 0.0
      %1309 = vmatpush1.msra.mxu0 0.0
      %1310 = vmatprep.subr.mxu0 0.0
      %1311 = vmatpush1.msra.mxu0 0.0
      %1312 = vmatprep.subr.mxu0 0.0
      %1313 = vmatpush1.msra.mxu0 0.0
      %1314 = vmatprep.subr.mxu0 0.0
      %1315 = vmatpush1.msra.mxu0 0.0
      %1316 = vmatprep.subr.mxu0 0.0
      %1317 = vmatpush1.msra.mxu0 0.0
      %1318 = vmatprep.subr.mxu0 0.0
      %1319 = vmatpush1.msra.mxu0 0.0
      %1320 = vmatprep.subr.mxu0 0.0
      %1321 = vmatpush1.msra.mxu0 0.0
      %1322 = vmatprep.subr.mxu0 0.0
      %1323 = vmatpush1.msra.mxu0 0.0
      %1324 = vmatprep.subr.mxu0 0.0
      %1325 = vmatpush1.msra.mxu0 0.0
      %1326 = vmatprep.subr.mxu0 0.0
      %1327 = vmatpush1.msra.mxu0 0.0
      %1328 = vmatprep.subr.mxu0 0.0
      %1329 = vmatpush1.msra.mxu0 0.0
      %1330 = vmatprep.subr.mxu0 0.0
      %1331 = vmatpush1.msra.mxu0 0.0
      %1332 = vmatprep.subr.mxu0 0.0
      %1333 = vmatpush1.msra.mxu0 0.0
      %1334 = vmatprep.subr.mxu0 0.0
      %1335 = vmatpush1.msra.mxu0 0.0
      %1336 = vmatprep.subr.mxu0 0.0
      %1337 = vmatpush1.msra.mxu0 0.0
      %1338 = vmatprep.subr.mxu0 0.0
      %1339 = vmatpush1.msra.mxu0 0.0
      %1340 = vmatprep.subr.mxu0 0.0
      %1341 = vmatpush1.msra.mxu0 0.0
      %1342 = vmatprep.subr.mxu0 0.0
      %1343 = vmatpush1.msra.mxu0 0.0
      %1344 = vmatprep.subr.mxu0 0.0
      %1345 = vmatpush1.msra.mxu0 0.0
      %1346 = vmatprep.subr.mxu0 0.0
      %1347 = vmatpush1.msra.mxu0 0.0
      %1348 = vmatprep.subr.mxu0 0.0
      %1349 = vmatpush1.msra.mxu0 0.0
      %1350 = vmatprep.subr.mxu0 0.0
      %1351 = vmatpush1.msra.mxu0 0.0
      %1352 = vmatprep.subr.mxu0 0.0
      %1353 = vmatpush1.msra.mxu0 0.0
      %1354 = vmatprep.subr.mxu0 0.0
      %1355 = vmatpush1.msra.mxu0 0.0
      %1356 = vmatprep.subr.mxu0 0.0
      %1357 = vmatpush1.msra.mxu0 0.0
      %1358 = vmatprep.subr.mxu0 0.0
      %1359 = vmatpush1.msra.mxu0 0.0
      %1360 = vmatprep.subr.mxu0 0.0
      %1361 = vmatpush1.msra.mxu0 0.0
      %1362 = vmatprep.subr.mxu0 0.0
      %1363 = vmatpush1.msra.mxu0 0.0
      %1364 = vmatprep.subr.mxu0 0.0
      %1365 = vmatpush1.msra.mxu0 0.0
      %1366 = vmatprep.subr.mxu0 0.0
      %1367 = vmatpush1.msra.mxu0 0.0
      %1368 = vmatprep.mubr.f32.mxu0 0.0
      %1369 = vmatmul.mubr.f32.gmra.mrb[0].mxu0 %v1113
      %v1370 = vpop.f32.mrb[0].mxu0
      %v1371 = vadd.f32 0.0, %v1370
      %v1372 = vpop.f32.mrb[0].mxu0
      %1373 = vmatprep.mubr.f32.mxu0 0.0
      %1374 = vmatmul.mubr.f32.gmra.mrb[0].mxu0 %v1116
      %v1375 = vpop.f32.mrb[0].mxu0
      %v1376 = vadd.f32 0.0, %v1375
      %v1377 = vpop.f32.mrb[0].mxu0
      %1378 = vmatprep.mubr.f32.mxu0 0.0
      %1379 = vmatmul.mubr.f32.gmra.mrb[0].mxu0 %v1119
      %v1380 = vpop.f32.mrb[0].mxu0
      %v1381 = vadd.f32 0.0, %v1380
      %v1382 = vpop.f32.mrb[0].mxu0
      %1383 = vmatprep.mubr.f32.mxu0 0.0
      %1384 = vmatmul.mubr.f32.gmra.mrb[0].mxu0 %v1122
      %v1385 = vpop.f32.mrb[0].mxu0
      %v1386 = vadd.f32 0.0, %v1385
      %v1387 = vpop.f32.mrb[0].mxu0
      %1388 = vmatprep.mubr.f32.mxu0 0.0
      %1389 = vmatmul.mubr.f32.gmra.mrb[0].mxu0 %v1125
      %v1390 = vpop.f32.mrb[0].mxu0
      %v1391 = vadd.f32 0.0, %v1390
      %v1392 = vpop.f32.mrb[0].mxu0
      %1393 = vmatprep.mubr.f32.mxu0 0.0
      %1394 = vmatmul.mubr.f32.gmra.mrb[0].mxu0 %v1128
      %v1395 = vpop.f32.mrb[0].mxu0
      %v1396 = vadd.f32 0.0, %v1395
      %v1397 = vpop.f32.mrb[0].mxu0
      %1398 = vmatprep.mubr.f32.mxu0 0.0
      %1399 = vmatmul.mubr.f32.gmra.mrb[0].mxu0 %v1131
      %v1400 = vpop.f32.mrb[0].mxu0
      %v1401 = vadd.f32 0.0, %v1400
      %v1402 = vpop.f32.mrb[0].mxu0
      %1403 = vmatprep.mubr.f32.mxu0 0.0
      %1404 = vmatmul.mubr.f32.gmra.mrb[0].mxu0 %v1134
      %v1405 = vpop.f32.mrb[0].mxu0
      %v1406 = vadd.f32 0.0, %v1405
      %v1407 = vpop.f32.mrb[0].mxu0
      %1408 = vmatprep.mubr.f32.mxu0 0.0
      %1409 = vmatmul.mubr.f32.gmra.mrb[0].mxu0 %v1137
      %v1410 = vpop.f32.mrb[0].mxu0
      %v1411 = vadd.f32 0.0, %v1410
      %v1412 = vpop.f32.mrb[0].mxu0
      %1413 = vmatprep.mubr.f32.mxu0 0.0
      %1414 = vmatmul.mubr.f32.gmra.mrb[0].mxu0 %v1140
      %v1415 = vpop.f32.mrb[0].mxu0
      %v1416 = vadd.f32 0.0, %v1415
      %v1417 = vpop.f32.mrb[0].mxu0
      %1418 = vmatprep.mubr.f32.mxu0 0.0
      %1419 = vmatmul.mubr.f32.gmra.mrb[0].mxu0 %v1143
      %v1420 = vpop.f32.mrb[0].mxu0
      %v1421 = vadd.f32 0.0, %v1420
      %v1422 = vpop.f32.mrb[0].mxu0
      %1423 = vmatprep.mubr.f32.mxu0 0.0
      %1424 = vmatmul.mubr.f32.gmra.mrb[0].mxu0 %v1146
      %v1425 = vpop.f32.mrb[0].mxu0
      %v1426 = vadd.f32 0.0, %v1425
      %v1427 = vpop.f32.mrb[0].mxu0
      %1428 = vmatprep.mubr.f32.mxu0 0.0
      %1429 = vmatmul.mubr.f32.gmra.mrb[0].mxu0 %v1149
      %v1430 = vpop.f32.mrb[0].mxu0
      %v1431 = vadd.f32 0.0, %v1430
      %v1432 = vpop.f32.mrb[0].mxu0
      %1433 = vmatprep.mubr.f32.mxu0 0.0
      %1434 = vmatmul.mubr.f32.gmra.mrb[0].mxu0 %v1152
      %v1435 = vpop.f32.mrb[0].mxu0
      %v1436 = vadd.f32 0.0, %v1435
      %v1437 = vpop.f32.mrb[0].mxu0
      %1438 = vmatprep.mubr.f32.mxu0 0.0
      %1439 = vmatmul.mubr.f32.gmra.mrb[0].mxu0 %v1155
      %v1440 = vpop.f32.mrb[0].mxu0
      %v1441 = vadd.f32 0.0, %v1440
      %v1442 = vpop.f32.mrb[0].mxu0
      %1443 = vmatprep.mubr.f32.mxu0 0.0
      %1444 = vmatmul.mubr.f32.gmra.mrb[0].mxu0 %v1158
      %v1445 = vpop.f32.mrb[0].mxu0
      %v1446 = vadd.f32 0.0, %v1445
      %v1447 = vpop.f32.mrb[0].mxu0
      %1448 = vmatprep.mubr.f32.mxu0 0.0
      %1449 = vmatmul.mubr.f32.gmra.mrb[0].mxu0 %v1161
      %v1450 = vpop.f32.mrb[0].mxu0
      %v1451 = vadd.f32 0.0, %v1450
      %v1452 = vpop.f32.mrb[0].mxu0
      %1453 = vmatprep.mubr.f32.mxu0 0.0
      %1454 = vmatmul.mubr.f32.gmra.mrb[0].mxu0 %v1164
      %v1455 = vpop.f32.mrb[0].mxu0
      %v1456 = vadd.f32 0.0, %v1455
      %v1457 = vpop.f32.mrb[0].mxu0
      %1458 = vmatprep.mubr.f32.mxu0 0.0
      %1459 = vmatmul.mubr.f32.gmra.mrb[0].mxu0 %v1167
      %v1460 = vpop.f32.mrb[0].mxu0
      %v1461 = vadd.f32 0.0, %v1460
      %v1462 = vpop.f32.mrb[0].mxu0
      %1463 = vmatprep.mubr.f32.mxu0 0.0
      %1464 = vmatmul.mubr.f32.gmra.mrb[0].mxu0 %v1170
      %v1465 = vpop.f32.mrb[0].mxu0
      %v1466 = vadd.f32 0.0, %v1465
      %v1467 = vpop.f32.mrb[0].mxu0
      %1468 = vmatprep.mubr.f32.mxu0 0.0
      %1469 = vmatmul.mubr.f32.gmra.mrb[0].mxu0 %v1173
      %v1470 = vpop.f32.mrb[0].mxu0
      %v1471 = vadd.f32 0.0, %v1470
      %v1472 = vpop.f32.mrb[0].mxu0
      %1473 = vmatprep.mubr.f32.mxu0 0.0
      %1474 = vmatmul.mubr.f32.gmra.mrb[0].mxu0 %v1176
      %v1475 = vpop.f32.mrb[0].mxu0
      %v1476 = vadd.f32 0.0, %v1475
      %v1477 = vpop.f32.mrb[0].mxu0
      %1478 = vmatprep.mubr.f32.mxu0 0.0
      %1479 = vmatmul.mubr.f32.gmra.mrb[0].mxu0 %v1179
      %v1480 = vpop.f32.mrb[0].mxu0
      %v1481 = vadd.f32 0.0, %v1480
      %v1482 = vpop.f32.mrb[0].mxu0
      %1483 = vmatprep.mubr.f32.mxu0 0.0
      %1484 = vmatmul.mubr.f32.gmra.mrb[0].mxu0 %v1182
      %v1485 = vpop.f32.mrb[0].mxu0
      %v1486 = vadd.f32 0.0, %v1485
      %v1487 = vpop.f32.mrb[0].mxu0
      %1488 = vmatprep.mubr.f32.mxu0 0.0
      %1489 = vmatmul.mubr.f32.gmra.mrb[0].mxu0 %v1185
      %v1490 = vpop.f32.mrb[0].mxu0
      %v1491 = vadd.f32 0.0, %v1490
      %v1492 = vpop.f32.mrb[0].mxu0
      %1493 = vmatprep.mubr.f32.mxu0 0.0
      %1494 = vmatmul.mubr.f32.gmra.mrb[0].mxu0 %v1188
      %v1495 = vpop.f32.mrb[0].mxu0
      %v1496 = vadd.f32 0.0, %v1495
      %v1497 = vpop.f32.mrb[0].mxu0
      %1498 = vmatprep.mubr.f32.mxu0 0.0
      %1499 = vmatmul.mubr.f32.gmra.mrb[0].mxu0 %v1191
      %v1500 = vpop.f32.mrb[0].mxu0
      %v1501 = vadd.f32 0.0, %v1500
      %v1502 = vpop.f32.mrb[0].mxu0
      %1503 = vmatprep.mubr.f32.mxu0 0.0
      %1504 = vmatmul.mubr.f32.gmra.mrb[0].mxu0 %v1194
      %v1505 = vpop.f32.mrb[0].mxu0
      %v1506 = vadd.f32 0.0, %v1505
      %v1507 = vpop.f32.mrb[0].mxu0
      %1508 = vmatprep.mubr.f32.mxu0 0.0
      %1509 = vmatmul.mubr.f32.gmra.mrb[0].mxu0 %v1197
      %v1510 = vpop.f32.mrb[0].mxu0
      %v1511 = vadd.f32 0.0, %v1510
      %v1512 = vpop.f32.mrb[0].mxu0
      %1513 = vmatprep.mubr.f32.mxu0 0.0
      %1514 = vmatmul.mubr.f32.gmra.mrb[0].mxu0 %v1200
      %v1515 = vpop.f32.mrb[0].mxu0
      %v1516 = vadd.f32 0.0, %v1515
      %v1517 = vpop.f32.mrb[0].mxu0
      %1518 = vmatprep.mubr.f32.mxu0 0.0
      %1519 = vmatmul.mubr.f32.gmra.mrb[0].mxu0 %v1203
      %v1520 = vpop.f32.mrb[0].mxu0
      %v1521 = vadd.f32 0.0, %v1520
      %v1522 = vpop.f32.mrb[0].mxu0
      %1523 = vmatprep.mubr.f32.mxu0 0.0
      %1524 = vmatmul.mubr.f32.gmra.mrb[0].mxu0 %v1206
      %v1525 = vpop.f32.mrb[0].mxu0
      %v1526 = vadd.f32 0.0, %v1525
      %v1527 = vpop.f32.mrb[0].mxu0
      %1528 = vmatprep.mubr.f32.mxu0 0.0
      %1529 = vmatmul.mubr.f32.gmra.mrb[0].mxu0 %v1209
      %v1530 = vpop.f32.mrb[0].mxu0
      %v1531 = vadd.f32 0.0, %v1530
      %v1532 = vpop.f32.mrb[0].mxu0
      %1533 = vmatprep.mubr.f32.mxu0 0.0
      %1534 = vmatmul.mubr.f32.gmra.mrb[0].mxu0 %v1212
      %v1535 = vpop.f32.mrb[0].mxu0
      %v1536 = vadd.f32 0.0, %v1535
      %v1537 = vpop.f32.mrb[0].mxu0
      %1538 = vmatprep.mubr.f32.mxu0 0.0
      %1539 = vmatmul.mubr.f32.gmra.mrb[0].mxu0 %v1215
      %v1540 = vpop.f32.mrb[0].mxu0
      %v1541 = vadd.f32 0.0, %v1540
      %v1542 = vpop.f32.mrb[0].mxu0
      %1543 = vmatprep.mubr.f32.mxu0 0.0
      %1544 = vmatmul.mubr.f32.gmra.mrb[0].mxu0 %v1218
      %v1545 = vpop.f32.mrb[0].mxu0
      %v1546 = vadd.f32 0.0, %v1545
      %v1547 = vpop.f32.mrb[0].mxu0
      %1548 = vmatprep.mubr.f32.mxu0 0.0
      %1549 = vmatmul.mubr.f32.gmra.mrb[0].mxu0 %v1221
      %v1550 = vpop.f32.mrb[0].mxu0
      %v1551 = vadd.f32 0.0, %v1550
      %v1552 = vpop.f32.mrb[0].mxu0
      %1553 = vmatprep.mubr.f32.mxu0 0.0
      %1554 = vmatmul.mubr.f32.gmra.mrb[0].mxu0 %v1224
      %v1555 = vpop.f32.mrb[0].mxu0
      %v1556 = vadd.f32 0.0, %v1555
      %v1557 = vpop.f32.mrb[0].mxu0
      %1558 = vmatprep.mubr.f32.mxu0 0.0
      %1559 = vmatmul.mubr.f32.gmra.mrb[0].mxu0 %v1227
      %v1560 = vpop.f32.mrb[0].mxu0
      %v1561 = vadd.f32 0.0, %v1560
      %v1562 = vpop.f32.mrb[0].mxu0
      %1563 = vmatprep.mubr.f32.mxu0 0.0
      %1564 = vmatmul.mubr.f32.gmra.mrb[0].mxu0 %v1230
      %v1565 = vpop.f32.mrb[0].mxu0
      %v1566 = vadd.f32 0.0, %v1565
      %v1567 = vpop.f32.mrb[0].mxu0
      %1568 = vmatprep.mubr.f32.mxu0 0.0
      %1569 = vmatmul.mubr.f32.gmra.mrb[0].mxu0 %v1233
      %v1570 = vpop.f32.mrb[0].mxu0
      %v1571 = vadd.f32 0.0, %v1570
      %v1572 = vpop.f32.mrb[0].mxu0
      %1573 = vmatprep.mubr.f32.mxu0 0.0
      %1574 = vmatmul.mubr.f32.gmra.mrb[0].mxu0 %v1236
      %v1575 = vpop.f32.mrb[0].mxu0
      %v1576 = vadd.f32 0.0, %v1575
      %v1577 = vpop.f32.mrb[0].mxu0
      %1578 = vmatprep.mubr.f32.mxu0 0.0
      %1579 = vmatmul.mubr.f32.gmra.mrb[0].mxu0 %v1239
      %v1580 = vpop.f32.mrb[0].mxu0
      %v1581 = vadd.f32 0.0, %v1580
      %v1582 = vpop.f32.mrb[0].mxu0
      %1583 = vmatprep.mubr.f32.mxu0 0.0
      %1584 = vmatmul.mubr.f32.gmra.mrb[0].mxu0 %v1242
      %v1585 = vpop.f32.mrb[0].mxu0
      %v1586 = vadd.f32 0.0, %v1585
      %v1587 = vpop.f32.mrb[0].mxu0
      %1588 = vmatprep.mubr.f32.mxu0 0.0
      %1589 = vmatmul.mubr.f32.gmra.mrb[0].mxu0 %v1245
      %v1590 = vpop.f32.mrb[0].mxu0
      %v1591 = vadd.f32 0.0, %v1590
      %v1592 = vpop.f32.mrb[0].mxu0
      %1593 = vmatprep.mubr.f32.mxu0 0.0
      %1594 = vmatmul.mubr.f32.gmra.mrb[0].mxu0 %v1248
      %v1595 = vpop.f32.mrb[0].mxu0
      %v1596 = vadd.f32 0.0, %v1595
      %v1597 = vpop.f32.mrb[0].mxu0
      %1598 = vmatprep.mubr.f32.mxu0 0.0
      %1599 = vmatmul.mubr.f32.gmra.mrb[0].mxu0 %v1251
      %v1600 = vpop.f32.mrb[0].mxu0
      %v1601 = vadd.f32 0.0, %v1600
      %v1602 = vpop.f32.mrb[0].mxu0
      %1603 = vmatprep.mubr.f32.mxu0 0.0
      %1604 = vmatmul.mubr.f32.gmra.mrb[0].mxu0 %v1254
      %v1605 = vpop.f32.mrb[0].mxu0
      %v1606 = vadd.f32 0.0, %v1605
      %v1607 = vpop.f32.mrb[0].mxu0
      %1608 = vmatprep.mubr.f32.mxu0 0.0
      %1609 = vmatmul.mubr.f32.gmra.mrb[0].mxu0 %v1257
      %v1610 = vpop.f32.mrb[0].mxu0
      %v1611 = vadd.f32 0.0, %v1610
      %v1612 = vpop.f32.mrb[0].mxu0
      %1613 = vmatprep.mubr.f32.mxu0 0.0
      %1614 = vmatmul.mubr.f32.gmra.mrb[0].mxu0 %v1260
      %v1615 = vpop.f32.mrb[0].mxu0
      %v1616 = vadd.f32 0.0, %v1615
      %v1617 = vpop.f32.mrb[0].mxu0
      %1618 = vmatprep.mubr.f32.mxu0 0.0
      %1619 = vmatmul.mubr.f32.gmra.mrb[0].mxu0 %v1263
      %v1620 = vpop.f32.mrb[0].mxu0
      %v1621 = vadd.f32 0.0, %v1620
      %v1622 = vpop.f32.mrb[0].mxu0
      %1623 = vmatprep.mubr.f32.mxu0 0.0
      %1624 = vmatmul.mubr.f32.gmra.mrb[0].mxu0 %v1266
      %v1625 = vpop.f32.mrb[0].mxu0
      %v1626 = vadd.f32 0.0, %v1625
      %v1627 = vpop.f32.mrb[0].mxu0
      %1628 = vmatprep.mubr.f32.mxu0 0.0
      %1629 = vmatmul.mubr.f32.gmra.mrb[0].mxu0 %v1269
      %v1630 = vpop.f32.mrb[0].mxu0
      %v1631 = vadd.f32 0.0, %v1630
      %v1632 = vpop.f32.mrb[0].mxu0
      %1633 = vmatprep.mubr.f32.mxu0 0.0
      %1634 = vmatmul.mubr.f32.gmra.mrb[0].mxu0 %v1272
      %v1635 = vpop.f32.mrb[0].mxu0
      %v1636 = vadd.f32 0.0, %v1635
      %v1637 = vpop.f32.mrb[0].mxu0
      %1638 = vmatprep.mubr.f32.mxu0 0.0
      %1639 = vmatmul.mubr.f32.gmra.mrb[0].mxu0 %v1275
      %v1640 = vpop.f32.mrb[0].mxu0
      %v1641 = vadd.f32 0.0, %v1640
      %v1642 = vpop.f32.mrb[0].mxu0
      %1643 = vmatprep.mubr.f32.mxu0 0.0
      %1644 = vmatmul.mubr.f32.gmra.mrb[0].mxu0 %v1278
      %v1645 = vpop.f32.mrb[0].mxu0
      %v1646 = vadd.f32 0.0, %v1645
      %v1647 = vpop.f32.mrb[0].mxu0
      %1648 = vmatprep.mubr.f32.mxu0 0.0
      %1649 = vmatmul.mubr.f32.gmra.mrb[0].mxu0 %v1281
      %v1650 = vpop.f32.mrb[0].mxu0
      %v1651 = vadd.f32 0.0, %v1650
      %v1652 = vpop.f32.mrb[0].mxu0
      %1653 = vmatprep.mubr.f32.mxu0 0.0
      %1654 = vmatmul.mubr.f32.gmra.mrb[0].mxu0 %v1284
      %v1655 = vpop.f32.mrb[0].mxu0
      %v1656 = vadd.f32 0.0, %v1655
      %v1657 = vpop.f32.mrb[0].mxu0
      %1658 = vmatprep.mubr.f32.mxu0 0.0
      %1659 = vmatmul.mubr.f32.gmra.mrb[0].mxu0 %v1287
      %v1660 = vpop.f32.mrb[0].mxu0
      %v1661 = vadd.f32 0.0, %v1660
      %v1662 = vpop.f32.mrb[0].mxu0
      %1663 = vmatprep.mubr.f32.mxu0 0.0
      %1664 = vmatmul.mubr.f32.gmra.mrb[0].mxu0 %v1290
      %v1665 = vpop.f32.mrb[0].mxu0
      %v1666 = vadd.f32 0.0, %v1665
      %v1667 = vpop.f32.mrb[0].mxu0
      %1668 = vmatprep.mubr.f32.mxu0 0.0
      %1669 = vmatmul.mubr.f32.gmra.mrb[0].mxu0 %v1293
      %v1670 = vpop.f32.mrb[0].mxu0
      %v1671 = vadd.f32 0.0, %v1670
      %v1672 = vpop.f32.mrb[0].mxu0
      %1673 = vmatprep.mubr.f32.mxu0 0.0
      %1674 = vmatmul.mubr.f32.gmra.mrb[0].mxu0 %v1296
      %v1675 = vpop.f32.mrb[0].mxu0
      %v1676 = vadd.f32 0.0, %v1675
      %v1677 = vpop.f32.mrb[0].mxu0
      %1678 = vmatprep.mubr.f32.mxu0 0.0
      %1679 = vmatmul.mubr.f32.gmra.mrb[0].mxu0 %v1299
      %v1680 = vpop.f32.mrb[0].mxu0
      %v1681 = vadd.f32 0.0, %v1680
      %v1682 = vpop.f32.mrb[0].mxu0
      %1683 = vmatprep.mubr.f32.mxu0 0.0
      %1684 = vmatmul.mubr.f32.gmra.mrb[0].mxu0 %v1302
      %v1685 = vpop.f32.mrb[0].mxu0
      %v1686 = vadd.f32 0.0, %v1685
      %v1687 = vpop.f32.mrb[0].mxu0
      %1688 = vdwg.mxu0
      %v1689 = vadd.f32 %v982, %v1371
      %v1690 = vadd.f32 %v983, %v1376
      %v1691 = vadd.f32 %v984, %v1381
      %v1692 = vadd.f32 %v985, %v1386
      %v1693 = vadd.f32 %v986, %v1391
      %v1694 = vadd.f32 %v987, %v1396
      %v1695 = vadd.f32 %v988, %v1401
      %v1696 = vadd.f32 %v989, %v1406
      %v1697 = vadd.f32 %v990, %v1411
      %v1698 = vadd.f32 %v991, %v1416
      %v1699 = vadd.f32 %v992, %v1421
      %v1700 = vadd.f32 %v993, %v1426
      %v1701 = vadd.f32 %v994, %v1431
      %v1702 = vadd.f32 %v995, %v1436
      %v1703 = vadd.f32 %v996, %v1441
      %v1704 = vadd.f32 %v997, %v1446
      %v1705 = vadd.f32 %v998, %v1451
      %v1706 = vadd.f32 %v999, %v1456
      %v1707 = vadd.f32 %v1000, %v1461
      %v1708 = vadd.f32 %v1001, %v1466
      %v1709 = vadd.f32 %v1002, %v1471
      %v1710 = vadd.f32 %v1003, %v1476
      %v1711 = vadd.f32 %v1004, %v1481
      %v1712 = vadd.f32 %v1005, %v1486
      %v1713 = vadd.f32 %v1006, %v1491
      %v1714 = vadd.f32 %v1007, %v1496
      %v1715 = vadd.f32 %v1008, %v1501
      %v1716 = vadd.f32 %v1009, %v1506
      %v1717 = vadd.f32 %v1010, %v1511
      %v1718 = vadd.f32 %v1011, %v1516
      %v1719 = vadd.f32 %v1012, %v1521
      %v1720 = vadd.f32 %v1013, %v1526
      %v1721 = vadd.f32 %v1014, %v1531
      %v1722 = vadd.f32 %v1015, %v1536
      %v1723 = vadd.f32 %v1016, %v1541
      %v1724 = vadd.f32 %v1017, %v1546
      %v1725 = vadd.f32 %v1018, %v1551
      %v1726 = vadd.f32 %v1019, %v1556
      %v1727 = vadd.f32 %v1020, %v1561
      %v1728 = vadd.f32 %v1021, %v1566
      %v1729 = vadd.f32 %v1022, %v1571
      %v1730 = vadd.f32 %v1023, %v1576
      %v1731 = vadd.f32 %v1024, %v1581
      %v1732 = vadd.f32 %v1025, %v1586
      %v1733 = vadd.f32 %v1026, %v1591
      %v1734 = vadd.f32 %v1027, %v1596
      %v1735 = vadd.f32 %v1028, %v1601
      %v1736 = vadd.f32 %v1029, %v1606
      %v1737 = vadd.f32 %v1030, %v1611
      %v1738 = vadd.f32 %v1031, %v1616
      %v1739 = vadd.f32 %v1032, %v1621
      %v1740 = vadd.f32 %v1033, %v1626
      %v1741 = vadd.f32 %v1034, %v1631
      %v1742 = vadd.f32 %v1035, %v1636
      %v1743 = vadd.f32 %v1036, %v1641
      %v1744 = vadd.f32 %v1037, %v1646
      %v1745 = vadd.f32 %v1038, %v1651
      %v1746 = vadd.f32 %v1039, %v1656
      %v1747 = vadd.f32 %v1040, %v1661
      %v1748 = vadd.f32 %v1041, %v1666
      %v1749 = vadd.f32 %v1042, %v1671
      %v1750 = vadd.f32 %v1043, %v1676
      %v1751 = vadd.f32 %v1044, %v1681
      %v1752 = vadd.f32 %v1045, %v1686
      %v1753 = vld [vmem:[%s4] sm:$0xff]
      %v1754 = vld [vmem:[%s4 + $0x8] sm:$0xff]
      %v1755 = vld [vmem:[%s5] sm:$0x1]
      %v1757 = vlaneseq
      %v1758 = vshrl.u32 %v1757, 7
      %v1759 = vsub.s32 0, %v1758
      %v1760 = vrot.slane %v1755, %v1759
      %v1763 = vsel %vm398, %v1689, 0
      %v1766 = vsel %vm398, %v1690, 0
      %v1769 = vsel %vm398, %v1691, 0
      %v1772 = vsel %vm398, %v1692, 0
      %v1775 = vsel %vm398, %v1693, 0
      %v1778 = vsel %vm398, %v1694, 0
      %v1781 = vsel %vm398, %v1695, 0
      %v1784 = vsel %vm398, %v1696, 0
      %v1787 = vsel %vm398, %v1697, 0
      %v1790 = vsel %vm398, %v1698, 0
      %v1793 = vsel %vm398, %v1699, 0
      %v1796 = vsel %vm398, %v1700, 0
      %v1799 = vsel %vm398, %v1701, 0
      %v1802 = vsel %vm398, %v1702, 0
      %v1805 = vsel %vm398, %v1703, 0
      %v1808 = vsel %vm398, %v1704, 0
      %v1811 = vsel %vm398, %v1705, 0
      %v1814 = vsel %vm398, %v1706, 0
      %v1817 = vsel %vm398, %v1707, 0
      %v1820 = vsel %vm398, %v1708, 0
      %v1823 = vsel %vm398, %v1709, 0
      %v1826 = vsel %vm398, %v1710, 0
      %v1829 = vsel %vm398, %v1711, 0
      %v1832 = vsel %vm398, %v1712, 0
      %v1835 = vsel %vm398, %v1713, 0
      %v1838 = vsel %vm398, %v1714, 0
      %v1841 = vsel %vm398, %v1715, 0
      %v1844 = vsel %vm398, %v1716, 0
      %v1847 = vsel %vm398, %v1717, 0
      %v1850 = vsel %vm398, %v1718, 0
      %v1853 = vsel %vm398, %v1719, 0
      %v1856 = vsel %vm398, %v1720, 0
      %v1859 = vsel %vm398, %v1721, 0
      %v1862 = vsel %vm398, %v1722, 0
      %v1865 = vsel %vm398, %v1723, 0
      %v1868 = vsel %vm398, %v1724, 0
      %v1871 = vsel %vm398, %v1725, 0
      %v1874 = vsel %vm398, %v1726, 0
      %v1877 = vsel %vm398, %v1727, 0
      %v1880 = vsel %vm398, %v1728, 0
      %v1883 = vsel %vm398, %v1729, 0
      %v1886 = vsel %vm398, %v1730, 0
      %v1889 = vsel %vm398, %v1731, 0
      %v1892 = vsel %vm398, %v1732, 0
      %v1895 = vsel %vm398, %v1733, 0
      %v1898 = vsel %vm398, %v1734, 0
      %v1901 = vsel %vm398, %v1735, 0
      %v1904 = vsel %vm398, %v1736, 0
      %v1907 = vsel %vm398, %v1737, 0
      %v1910 = vsel %vm398, %v1738, 0
      %v1913 = vsel %vm398, %v1739, 0
      %v1916 = vsel %vm398, %v1740, 0
      %v1919 = vsel %vm398, %v1741, 0
      %v1922 = vsel %vm398, %v1742, 0
      %v1925 = vsel %vm398, %v1743, 0
      %v1928 = vsel %vm398, %v1744, 0
      %v1931 = vsel %vm398, %v1745, 0
      %v1934 = vsel %vm398, %v1746, 0
      %v1937 = vsel %vm398, %v1747, 0
      %v1940 = vsel %vm398, %v1748, 0
      %v1943 = vsel %vm398, %v1749, 0
      %v1946 = vsel %vm398, %v1750, 0
      %v1949 = vsel %vm398, %v1751, 0
      %v1952 = vsel %vm398, %v1752, 0
      %1954 = vmatprep.subr.mxu0 0.0
      %1955 = vmatpush1.msra.mxu0 %v1753
      %1956 = vmatprep.subr.mxu0 0.0
      %1957 = vmatpush1.msra.mxu0 %v1754
      %1958 = vmatprep.subr.mxu0 0.0
      %1959 = vmatpush1.msra.mxu0 0.0
      %1960 = vmatprep.subr.mxu0 0.0
      %1961 = vmatpush1.msra.mxu0 0.0
      %1962 = vmatprep.subr.mxu0 0.0
      %1963 = vmatpush1.msra.mxu0 0.0
      %1964 = vmatprep.subr.mxu0 0.0
      %1965 = vmatpush1.msra.mxu0 0.0
      %1966 = vmatprep.subr.mxu0 0.0
      %1967 = vmatpush1.msra.mxu0 0.0
      %1968 = vmatprep.subr.mxu0 0.0
      %1969 = vmatpush1.msra.mxu0 0.0
      %1970 = vmatprep.subr.mxu0 0.0
      %1971 = vmatpush1.msra.mxu0 0.0
      %1972 = vmatprep.subr.mxu0 0.0
      %1973 = vmatpush1.msra.mxu0 0.0
      %1974 = vmatprep.subr.mxu0 0.0
      %1975 = vmatpush1.msra.mxu0 0.0
      %1976 = vmatprep.subr.mxu0 0.0
      %1977 = vmatpush1.msra.mxu0 0.0
      %1978 = vmatprep.subr.mxu0 0.0
      %1979 = vmatpush1.msra.mxu0 0.0
      %1980 = vmatprep.subr.mxu0 0.0
      %1981 = vmatpush1.msra.mxu0 0.0
      %1982 = vmatprep.subr.mxu0 0.0
      %1983 = vmatpush1.msra.mxu0 0.0
      %1984 = vmatprep.subr.mxu0 0.0
      %1985 = vmatpush1.msra.mxu0 0.0
      %1986 = vmatprep.subr.mxu0 0.0
      %1987 = vmatpush1.msra.mxu0 0.0
      %1988 = vmatprep.subr.mxu0 0.0
      %1989 = vmatpush1.msra.mxu0 0.0
      %1990 = vmatprep.subr.mxu0 0.0
      %1991 = vmatpush1.msra.mxu0 0.0
      %1992 = vmatprep.subr.mxu0 0.0
      %1993 = vmatpush1.msra.mxu0 0.0
      %1994 = vmatprep.subr.mxu0 0.0
      %1995 = vmatpush1.msra.mxu0 0.0
      %1996 = vmatprep.subr.mxu0 0.0
      %1997 = vmatpush1.msra.mxu0 0.0
      %1998 = vmatprep.subr.mxu0 0.0
      %1999 = vmatpush1.msra.mxu0 0.0
      %2000 = vmatprep.subr.mxu0 0.0
      %2001 = vmatpush1.msra.mxu0 0.0
      %2002 = vmatprep.subr.mxu0 0.0
      %2003 = vmatpush1.msra.mxu0 0.0
      %2004 = vmatprep.subr.mxu0 0.0
      %2005 = vmatpush1.msra.mxu0 0.0
      %2006 = vmatprep.subr.mxu0 0.0
      %2007 = vmatpush1.msra.mxu0 0.0
      %2008 = vmatprep.subr.mxu0 0.0
      %2009 = vmatpush1.msra.mxu0 0.0
      %2010 = vmatprep.subr.mxu0 0.0
      %2011 = vmatpush1.msra.mxu0 0.0
      %2012 = vmatprep.subr.mxu0 0.0
      %2013 = vmatpush1.msra.mxu0 0.0
      %2014 = vmatprep.subr.mxu0 0.0
      %2015 = vmatpush1.msra.mxu0 0.0
      %2016 = vmatprep.subr.mxu0 0.0
      %2017 = vmatpush1.msra.mxu0 0.0
      %2018 = vmatprep.mubr.f32.mxu0 0.0
      %2019 = vmatmul.mubr.f32.gmra.mrb[0].mxu0 %v1763
      %v2020 = vpop.f32.mrb[0].mxu0
      %v2021 = vadd.f32 %v1760, %v2020
      %v2022 = vpop.f32.mrb[0].mxu0
      %2023 = vmatprep.mubr.f32.mxu0 0.0
      %2024 = vmatmul.mubr.f32.gmra.mrb[0].mxu0 %v1766
      %v2025 = vpop.f32.mrb[0].mxu0
      %v2026 = vadd.f32 %v1760, %v2025
      %v2027 = vpop.f32.mrb[0].mxu0
      %2028 = vmatprep.mubr.f32.mxu0 0.0
      %2029 = vmatmul.mubr.f32.gmra.mrb[0].mxu0 %v1769
      %v2030 = vpop.f32.mrb[0].mxu0
      %v2031 = vadd.f32 %v1760, %v2030
      %v2032 = vpop.f32.mrb[0].mxu0
      %2033 = vmatprep.mubr.f32.mxu0 0.0
      %2034 = vmatmul.mubr.f32.gmra.mrb[0].mxu0 %v1772
      %v2035 = vpop.f32.mrb[0].mxu0
      %v2036 = vadd.f32 %v1760, %v2035
      %v2037 = vpop.f32.mrb[0].mxu0
      %2038 = vmatprep.mubr.f32.mxu0 0.0
      %2039 = vmatmul.mubr.f32.gmra.mrb[0].mxu0 %v1775
      %v2040 = vpop.f32.mrb[0].mxu0
      %v2041 = vadd.f32 %v1760, %v2040
      %v2042 = vpop.f32.mrb[0].mxu0
      %2043 = vmatprep.mubr.f32.mxu0 0.0
      %2044 = vmatmul.mubr.f32.gmra.mrb[0].mxu0 %v1778
      %v2045 = vpop.f32.mrb[0].mxu0
      %v2046 = vadd.f32 %v1760, %v2045
      %v2047 = vpop.f32.mrb[0].mxu0
      %2048 = vmatprep.mubr.f32.mxu0 0.0
      %2049 = vmatmul.mubr.f32.gmra.mrb[0].mxu0 %v1781
      %v2050 = vpop.f32.mrb[0].mxu0
      %v2051 = vadd.f32 %v1760, %v2050
      %v2052 = vpop.f32.mrb[0].mxu0
      %2053 = vmatprep.mubr.f32.mxu0 0.0
      %2054 = vmatmul.mubr.f32.gmra.mrb[0].mxu0 %v1784
      %v2055 = vpop.f32.mrb[0].mxu0
      %v2056 = vadd.f32 %v1760, %v2055
      %v2057 = vpop.f32.mrb[0].mxu0
      %2058 = vmatprep.mubr.f32.mxu0 0.0
      %2059 = vmatmul.mubr.f32.gmra.mrb[0].mxu0 %v1787
      %v2060 = vpop.f32.mrb[0].mxu0
      %v2061 = vadd.f32 %v1760, %v2060
      %v2062 = vpop.f32.mrb[0].mxu0
      %2063 = vmatprep.mubr.f32.mxu0 0.0
      %2064 = vmatmul.mubr.f32.gmra.mrb[0].mxu0 %v1790
      %v2065 = vpop.f32.mrb[0].mxu0
      %v2066 = vadd.f32 %v1760, %v2065
      %v2067 = vpop.f32.mrb[0].mxu0
      %2068 = vmatprep.mubr.f32.mxu0 0.0
      %2069 = vmatmul.mubr.f32.gmra.mrb[0].mxu0 %v1793
      %v2070 = vpop.f32.mrb[0].mxu0
      %v2071 = vadd.f32 %v1760, %v2070
      %v2072 = vpop.f32.mrb[0].mxu0
      %2073 = vmatprep.mubr.f32.mxu0 0.0
      %2074 = vmatmul.mubr.f32.gmra.mrb[0].mxu0 %v1796
      %v2075 = vpop.f32.mrb[0].mxu0
      %v2076 = vadd.f32 %v1760, %v2075
      %v2077 = vpop.f32.mrb[0].mxu0
      %2078 = vmatprep.mubr.f32.mxu0 0.0
      %2079 = vmatmul.mubr.f32.gmra.mrb[0].mxu0 %v1799
      %v2080 = vpop.f32.mrb[0].mxu0
      %v2081 = vadd.f32 %v1760, %v2080
      %v2082 = vpop.f32.mrb[0].mxu0
      %2083 = vmatprep.mubr.f32.mxu0 0.0
      %2084 = vmatmul.mubr.f32.gmra.mrb[0].mxu0 %v1802
      %v2085 = vpop.f32.mrb[0].mxu0
      %v2086 = vadd.f32 %v1760, %v2085
      %v2087 = vpop.f32.mrb[0].mxu0
      %2088 = vmatprep.mubr.f32.mxu0 0.0
      %2089 = vmatmul.mubr.f32.gmra.mrb[0].mxu0 %v1805
      %v2090 = vpop.f32.mrb[0].mxu0
      %v2091 = vadd.f32 %v1760, %v2090
      %v2092 = vpop.f32.mrb[0].mxu0
      %2093 = vmatprep.mubr.f32.mxu0 0.0
      %2094 = vmatmul.mubr.f32.gmra.mrb[0].mxu0 %v1808
      %v2095 = vpop.f32.mrb[0].mxu0
      %v2096 = vadd.f32 %v1760, %v2095
      %v2097 = vpop.f32.mrb[0].mxu0
      %2098 = vmatprep.mubr.f32.mxu0 0.0
      %2099 = vmatmul.mubr.f32.gmra.mrb[0].mxu0 %v1811
      %v2100 = vpop.f32.mrb[0].mxu0
      %v2101 = vadd.f32 %v1760, %v2100
      %v2102 = vpop.f32.mrb[0].mxu0
      %2103 = vmatprep.mubr.f32.mxu0 0.0
      %2104 = vmatmul.mubr.f32.gmra.mrb[0].mxu0 %v1814
      %v2105 = vpop.f32.mrb[0].mxu0
      %v2106 = vadd.f32 %v1760, %v2105
      %v2107 = vpop.f32.mrb[0].mxu0
      %2108 = vmatprep.mubr.f32.mxu0 0.0
      %2109 = vmatmul.mubr.f32.gmra.mrb[0].mxu0 %v1817
      %v2110 = vpop.f32.mrb[0].mxu0
      %v2111 = vadd.f32 %v1760, %v2110
      %v2112 = vpop.f32.mrb[0].mxu0
      %2113 = vmatprep.mubr.f32.mxu0 0.0
      %2114 = vmatmul.mubr.f32.gmra.mrb[0].mxu0 %v1820
      %v2115 = vpop.f32.mrb[0].mxu0
      %v2116 = vadd.f32 %v1760, %v2115
      %v2117 = vpop.f32.mrb[0].mxu0
      %2118 = vmatprep.mubr.f32.mxu0 0.0
      %2119 = vmatmul.mubr.f32.gmra.mrb[0].mxu0 %v1823
      %v2120 = vpop.f32.mrb[0].mxu0
      %v2121 = vadd.f32 %v1760, %v2120
      %v2122 = vpop.f32.mrb[0].mxu0
      %2123 = vmatprep.mubr.f32.mxu0 0.0
      %2124 = vmatmul.mubr.f32.gmra.mrb[0].mxu0 %v1826
      %v2125 = vpop.f32.mrb[0].mxu0
      %v2126 = vadd.f32 %v1760, %v2125
      %v2127 = vpop.f32.mrb[0].mxu0
      %2128 = vmatprep.mubr.f32.mxu0 0.0
      %2129 = vmatmul.mubr.f32.gmra.mrb[0].mxu0 %v1829
      %v2130 = vpop.f32.mrb[0].mxu0
      %v2131 = vadd.f32 %v1760, %v2130
      %v2132 = vpop.f32.mrb[0].mxu0
      %2133 = vmatprep.mubr.f32.mxu0 0.0
      %2134 = vmatmul.mubr.f32.gmra.mrb[0].mxu0 %v1832
      %v2135 = vpop.f32.mrb[0].mxu0
      %v2136 = vadd.f32 %v1760, %v2135
      %v2137 = vpop.f32.mrb[0].mxu0
      %2138 = vmatprep.mubr.f32.mxu0 0.0
      %2139 = vmatmul.mubr.f32.gmra.mrb[0].mxu0 %v1835
      %v2140 = vpop.f32.mrb[0].mxu0
      %v2141 = vadd.f32 %v1760, %v2140
      %v2142 = vpop.f32.mrb[0].mxu0
      %2143 = vmatprep.mubr.f32.mxu0 0.0
      %2144 = vmatmul.mubr.f32.gmra.mrb[0].mxu0 %v1838
      %v2145 = vpop.f32.mrb[0].mxu0
      %v2146 = vadd.f32 %v1760, %v2145
      %v2147 = vpop.f32.mrb[0].mxu0
      %2148 = vmatprep.mubr.f32.mxu0 0.0
      %2149 = vmatmul.mubr.f32.gmra.mrb[0].mxu0 %v1841
      %v2150 = vpop.f32.mrb[0].mxu0
      %v2151 = vadd.f32 %v1760, %v2150
      %v2152 = vpop.f32.mrb[0].mxu0
      %2153 = vmatprep.mubr.f32.mxu0 0.0
      %2154 = vmatmul.mubr.f32.gmra.mrb[0].mxu0 %v1844
      %v2155 = vpop.f32.mrb[0].mxu0
      %v2156 = vadd.f32 %v1760, %v2155
      %v2157 = vpop.f32.mrb[0].mxu0
      %2158 = vmatprep.mubr.f32.mxu0 0.0
      %2159 = vmatmul.mubr.f32.gmra.mrb[0].mxu0 %v1847
      %v2160 = vpop.f32.mrb[0].mxu0
      %v2161 = vadd.f32 %v1760, %v2160
      %v2162 = vpop.f32.mrb[0].mxu0
      %2163 = vmatprep.mubr.f32.mxu0 0.0
      %2164 = vmatmul.mubr.f32.gmra.mrb[0].mxu0 %v1850
      %v2165 = vpop.f32.mrb[0].mxu0
      %v2166 = vadd.f32 %v1760, %v2165
      %v2167 = vpop.f32.mrb[0].mxu0
      %2168 = vmatprep.mubr.f32.mxu0 0.0
      %2169 = vmatmul.mubr.f32.gmra.mrb[0].mxu0 %v1853
      %v2170 = vpop.f32.mrb[0].mxu0
      %v2171 = vadd.f32 %v1760, %v2170
      %v2172 = vpop.f32.mrb[0].mxu0
      %2173 = vmatprep.mubr.f32.mxu0 0.0
      %2174 = vmatmul.mubr.f32.gmra.mrb[0].mxu0 %v1856
      %v2175 = vpop.f32.mrb[0].mxu0
      %v2176 = vadd.f32 %v1760, %v2175
      %v2177 = vpop.f32.mrb[0].mxu0
      %2178 = vmatprep.mubr.f32.mxu0 0.0
      %2179 = vmatmul.mubr.f32.gmra.mrb[0].mxu0 %v1859
      %v2180 = vpop.f32.mrb[0].mxu0
      %v2181 = vadd.f32 %v1760, %v2180
      %v2182 = vpop.f32.mrb[0].mxu0
      %2183 = vmatprep.mubr.f32.mxu0 0.0
      %2184 = vmatmul.mubr.f32.gmra.mrb[0].mxu0 %v1862
      %v2185 = vpop.f32.mrb[0].mxu0
      %v2186 = vadd.f32 %v1760, %v2185
      %v2187 = vpop.f32.mrb[0].mxu0
      %2188 = vmatprep.mubr.f32.mxu0 0.0
      %2189 = vmatmul.mubr.f32.gmra.mrb[0].mxu0 %v1865
      %v2190 = vpop.f32.mrb[0].mxu0
      %v2191 = vadd.f32 %v1760, %v2190
      %v2192 = vpop.f32.mrb[0].mxu0
      %2193 = vmatprep.mubr.f32.mxu0 0.0
      %2194 = vmatmul.mubr.f32.gmra.mrb[0].mxu0 %v1868
      %v2195 = vpop.f32.mrb[0].mxu0
      %v2196 = vadd.f32 %v1760, %v2195
      %v2197 = vpop.f32.mrb[0].mxu0
      %2198 = vmatprep.mubr.f32.mxu0 0.0
      %2199 = vmatmul.mubr.f32.gmra.mrb[0].mxu0 %v1871
      %v2200 = vpop.f32.mrb[0].mxu0
      %v2201 = vadd.f32 %v1760, %v2200
      %v2202 = vpop.f32.mrb[0].mxu0
      %2203 = vmatprep.mubr.f32.mxu0 0.0
      %2204 = vmatmul.mubr.f32.gmra.mrb[0].mxu0 %v1874
      %v2205 = vpop.f32.mrb[0].mxu0
      %v2206 = vadd.f32 %v1760, %v2205
      %v2207 = vpop.f32.mrb[0].mxu0
      %2208 = vmatprep.mubr.f32.mxu0 0.0
      %2209 = vmatmul.mubr.f32.gmra.mrb[0].mxu0 %v1877
      %v2210 = vpop.f32.mrb[0].mxu0
      %v2211 = vadd.f32 %v1760, %v2210
      %v2212 = vpop.f32.mrb[0].mxu0
      %2213 = vmatprep.mubr.f32.mxu0 0.0
      %2214 = vmatmul.mubr.f32.gmra.mrb[0].mxu0 %v1880
      %v2215 = vpop.f32.mrb[0].mxu0
      %v2216 = vadd.f32 %v1760, %v2215
      %v2217 = vpop.f32.mrb[0].mxu0
      %2218 = vmatprep.mubr.f32.mxu0 0.0
      %2219 = vmatmul.mubr.f32.gmra.mrb[0].mxu0 %v1883
      %v2220 = vpop.f32.mrb[0].mxu0
      %v2221 = vadd.f32 %v1760, %v2220
      %v2222 = vpop.f32.mrb[0].mxu0
      %2223 = vmatprep.mubr.f32.mxu0 0.0
      %2224 = vmatmul.mubr.f32.gmra.mrb[0].mxu0 %v1886
      %v2225 = vpop.f32.mrb[0].mxu0
      %v2226 = vadd.f32 %v1760, %v2225
      %v2227 = vpop.f32.mrb[0].mxu0
      %2228 = vmatprep.mubr.f32.mxu0 0.0
      %2229 = vmatmul.mubr.f32.gmra.mrb[0].mxu0 %v1889
      %v2230 = vpop.f32.mrb[0].mxu0
      %v2231 = vadd.f32 %v1760, %v2230
      %v2232 = vpop.f32.mrb[0].mxu0
      %2233 = vmatprep.mubr.f32.mxu0 0.0
      %2234 = vmatmul.mubr.f32.gmra.mrb[0].mxu0 %v1892
      %v2235 = vpop.f32.mrb[0].mxu0
      %v2236 = vadd.f32 %v1760, %v2235
      %v2237 = vpop.f32.mrb[0].mxu0
      %2238 = vmatprep.mubr.f32.mxu0 0.0
      %2239 = vmatmul.mubr.f32.gmra.mrb[0].mxu0 %v1895
      %v2240 = vpop.f32.mrb[0].mxu0
      %v2241 = vadd.f32 %v1760, %v2240
      %v2242 = vpop.f32.mrb[0].mxu0
      %2243 = vmatprep.mubr.f32.mxu0 0.0
      %2244 = vmatmul.mubr.f32.gmra.mrb[0].mxu0 %v1898
      %v2245 = vpop.f32.mrb[0].mxu0
      %v2246 = vadd.f32 %v1760, %v2245
      %v2247 = vpop.f32.mrb[0].mxu0
      %2248 = vmatprep.mubr.f32.mxu0 0.0
      %2249 = vmatmul.mubr.f32.gmra.mrb[0].mxu0 %v1901
      %v2250 = vpop.f32.mrb[0].mxu0
      %v2251 = vadd.f32 %v1760, %v2250
      %v2252 = vpop.f32.mrb[0].mxu0
      %2253 = vmatprep.mubr.f32.mxu0 0.0
      %2254 = vmatmul.mubr.f32.gmra.mrb[0].mxu0 %v1904
      %v2255 = vpop.f32.mrb[0].mxu0
      %v2256 = vadd.f32 %v1760, %v2255
      %v2257 = vpop.f32.mrb[0].mxu0
      %2258 = vmatprep.mubr.f32.mxu0 0.0
      %2259 = vmatmul.mubr.f32.gmra.mrb[0].mxu0 %v1907
      %v2260 = vpop.f32.mrb[0].mxu0
      %v2261 = vadd.f32 %v1760, %v2260
      %v2262 = vpop.f32.mrb[0].mxu0
      %2263 = vmatprep.mubr.f32.mxu0 0.0
      %2264 = vmatmul.mubr.f32.gmra.mrb[0].mxu0 %v1910
      %v2265 = vpop.f32.mrb[0].mxu0
      %v2266 = vadd.f32 %v1760, %v2265
      %v2267 = vpop.f32.mrb[0].mxu0
      %2268 = vmatprep.mubr.f32.mxu0 0.0
      %2269 = vmatmul.mubr.f32.gmra.mrb[0].mxu0 %v1913
      %v2270 = vpop.f32.mrb[0].mxu0
      %v2271 = vadd.f32 %v1760, %v2270
      %v2272 = vpop.f32.mrb[0].mxu0
      %2273 = vmatprep.mubr.f32.mxu0 0.0
      %2274 = vmatmul.mubr.f32.gmra.mrb[0].mxu0 %v1916
      %v2275 = vpop.f32.mrb[0].mxu0
      %v2276 = vadd.f32 %v1760, %v2275
      %v2277 = vpop.f32.mrb[0].mxu0
      %2278 = vmatprep.mubr.f32.mxu0 0.0
      %2279 = vmatmul.mubr.f32.gmra.mrb[0].mxu0 %v1919
      %v2280 = vpop.f32.mrb[0].mxu0
      %v2281 = vadd.f32 %v1760, %v2280
      %v2282 = vpop.f32.mrb[0].mxu0
      %2283 = vmatprep.mubr.f32.mxu0 0.0
      %2284 = vmatmul.mubr.f32.gmra.mrb[0].mxu0 %v1922
      %v2285 = vpop.f32.mrb[0].mxu0
      %v2286 = vadd.f32 %v1760, %v2285
      %v2287 = vpop.f32.mrb[0].mxu0
      %2288 = vmatprep.mubr.f32.mxu0 0.0
      %2289 = vmatmul.mubr.f32.gmra.mrb[0].mxu0 %v1925
      %v2290 = vpop.f32.mrb[0].mxu0
      %v2291 = vadd.f32 %v1760, %v2290
      %v2292 = vpop.f32.mrb[0].mxu0
      %2293 = vmatprep.mubr.f32.mxu0 0.0
      %2294 = vmatmul.mubr.f32.gmra.mrb[0].mxu0 %v1928
      %v2295 = vpop.f32.mrb[0].mxu0
      %v2296 = vadd.f32 %v1760, %v2295
      %v2297 = vpop.f32.mrb[0].mxu0
      %2298 = vmatprep.mubr.f32.mxu0 0.0
      %2299 = vmatmul.mubr.f32.gmra.mrb[0].mxu0 %v1931
      %v2300 = vpop.f32.mrb[0].mxu0
      %v2301 = vadd.f32 %v1760, %v2300
      %v2302 = vpop.f32.mrb[0].mxu0
      %2303 = vmatprep.mubr.f32.mxu0 0.0
      %2304 = vmatmul.mubr.f32.gmra.mrb[0].mxu0 %v1934
      %v2305 = vpop.f32.mrb[0].mxu0
      %v2306 = vadd.f32 %v1760, %v2305
      %v2307 = vpop.f32.mrb[0].mxu0
      %2308 = vmatprep.mubr.f32.mxu0 0.0
      %2309 = vmatmul.mubr.f32.gmra.mrb[0].mxu0 %v1937
      %v2310 = vpop.f32.mrb[0].mxu0
      %v2311 = vadd.f32 %v1760, %v2310
      %v2312 = vpop.f32.mrb[0].mxu0
      %2313 = vmatprep.mubr.f32.mxu0 0.0
      %2314 = vmatmul.mubr.f32.gmra.mrb[0].mxu0 %v1940
      %v2315 = vpop.f32.mrb[0].mxu0
      %v2316 = vadd.f32 %v1760, %v2315
      %v2317 = vpop.f32.mrb[0].mxu0
      %2318 = vmatprep.mubr.f32.mxu0 0.0
      %2319 = vmatmul.mubr.f32.gmra.mrb[0].mxu0 %v1943
      %v2320 = vpop.f32.mrb[0].mxu0
      %v2321 = vadd.f32 %v1760, %v2320
      %v2322 = vpop.f32.mrb[0].mxu0
      %2323 = vmatprep.mubr.f32.mxu0 0.0
      %2324 = vmatmul.mubr.f32.gmra.mrb[0].mxu0 %v1946
      %v2325 = vpop.f32.mrb[0].mxu0
      %v2326 = vadd.f32 %v1760, %v2325
      %v2327 = vpop.f32.mrb[0].mxu0
      %2328 = vmatprep.mubr.f32.mxu0 0.0
      %2329 = vmatmul.mubr.f32.gmra.mrb[0].mxu0 %v1949
      %v2330 = vpop.f32.mrb[0].mxu0
      %v2331 = vadd.f32 %v1760, %v2330
      %v2332 = vpop.f32.mrb[0].mxu0
      %2333 = vmatprep.mubr.f32.mxu0 0.0
      %2334 = vmatmul.mubr.f32.gmra.mrb[0].mxu0 %v1952
      %v2335 = vpop.f32.mrb[0].mxu0
      %v2336 = vadd.f32 %v1760, %v2335
      %v2337 = vpop.f32.mrb[0].mxu0
      %2338 = vdwg.mxu0
      %v2339 = vtanh.pop %v2021
      %v2340 = vtanh.pop %v2026
      %v2341 = vtanh.pop %v2031
      %v2342 = vtanh.pop %v2036
      %v2343 = vtanh.pop %v2041
      %v2344 = vtanh.pop %v2046
      %v2345 = vtanh.pop %v2051
      %v2346 = vtanh.pop %v2056
      %v2347 = vtanh.pop %v2061
      %v2348 = vtanh.pop %v2066
      %v2349 = vtanh.pop %v2071
      %v2350 = vtanh.pop %v2076
      %v2351 = vtanh.pop %v2081
      %v2352 = vtanh.pop %v2086
      %v2353 = vtanh.pop %v2091
      %v2354 = vtanh.pop %v2096
      %v2355 = vtanh.pop %v2101
      %v2356 = vtanh.pop %v2106
      %v2357 = vtanh.pop %v2111
      %v2358 = vtanh.pop %v2116
      %v2359 = vtanh.pop %v2121
      %v2360 = vtanh.pop %v2126
      %v2361 = vtanh.pop %v2131
      %v2362 = vtanh.pop %v2136
      %v2363 = vtanh.pop %v2141
      %v2364 = vtanh.pop %v2146
      %v2365 = vtanh.pop %v2151
      %v2366 = vtanh.pop %v2156
      %v2367 = vtanh.pop %v2161
      %v2368 = vtanh.pop %v2166
      %v2369 = vtanh.pop %v2171
      %v2370 = vtanh.pop %v2176
      %v2371 = vtanh.pop %v2181
      %v2372 = vtanh.pop %v2186
      %v2373 = vtanh.pop %v2191
      %v2374 = vtanh.pop %v2196
      %v2375 = vtanh.pop %v2201
      %v2376 = vtanh.pop %v2206
      %v2377 = vtanh.pop %v2211
      %v2378 = vtanh.pop %v2216
      %v2379 = vtanh.pop %v2221
      %v2380 = vtanh.pop %v2226
      %v2381 = vtanh.pop %v2231
      %v2382 = vtanh.pop %v2236
      %v2383 = vtanh.pop %v2241
      %v2384 = vtanh.pop %v2246
      %v2385 = vtanh.pop %v2251
      %v2386 = vtanh.pop %v2256
      %v2387 = vtanh.pop %v2261
      %v2388 = vtanh.pop %v2266
      %v2389 = vtanh.pop %v2271
      %v2390 = vtanh.pop %v2276
      %v2391 = vtanh.pop %v2281
      %v2392 = vtanh.pop %v2286
      %v2393 = vtanh.pop %v2291
      %v2394 = vtanh.pop %v2296
      %v2395 = vtanh.pop %v2301
      %v2396 = vtanh.pop %v2306
      %v2397 = vtanh.pop %v2311
      %v2398 = vtanh.pop %v2316
      %v2399 = vtanh.pop %v2321
      %v2400 = vtanh.pop %v2326
      %v2401 = vtanh.pop %v2331
      %v2402 = vtanh.pop %v2336
      %v2403 = vld [vmem:[%s6] sm:$0xff]
      %v2404 = vld [vmem:[%s6 + $0x8] sm:$0xff]
      %v2405 = vld [vmem:[%s6 + $0x10] sm:$0xff]
      %v2406 = vld [vmem:[%s6 + $0x18] sm:$0xff]
      %v2407 = vld [vmem:[%s7] sm:$0x1]
      %v2409 = vlaneseq
      %v2410 = vshrl.u32 %v2409, 7
      %v2411 = vsub.s32 0, %v2410
      %v2412 = vrot.slane %v2407, %v2411
      %vm2414 = vcmask 261120
      %v2416 = vsel %vm2414, %v2339, 0
      %v2419 = vsel %vm2414, %v2340, 0
      %v2422 = vsel %vm2414, %v2341, 0
      %v2425 = vsel %vm2414, %v2342, 0
      %v2428 = vsel %vm2414, %v2343, 0
      %v2431 = vsel %vm2414, %v2344, 0
      %v2434 = vsel %vm2414, %v2345, 0
      %v2437 = vsel %vm2414, %v2346, 0
      %v2440 = vsel %vm2414, %v2347, 0
      %v2443 = vsel %vm2414, %v2348, 0
      %v2446 = vsel %vm2414, %v2349, 0
      %v2449 = vsel %vm2414, %v2350, 0
      %v2452 = vsel %vm2414, %v2351, 0
      %v2455 = vsel %vm2414, %v2352, 0
      %v2458 = vsel %vm2414, %v2353, 0
      %v2461 = vsel %vm2414, %v2354, 0
      %v2464 = vsel %vm2414, %v2355, 0
      %v2467 = vsel %vm2414, %v2356, 0
      %v2470 = vsel %vm2414, %v2357, 0
      %v2473 = vsel %vm2414, %v2358, 0
      %v2476 = vsel %vm2414, %v2359, 0
      %v2479 = vsel %vm2414, %v2360, 0
      %v2482 = vsel %vm2414, %v2361, 0
      %v2485 = vsel %vm2414, %v2362, 0
      %v2488 = vsel %vm2414, %v2363, 0
      %v2491 = vsel %vm2414, %v2364, 0
      %v2494 = vsel %vm2414, %v2365, 0
      %v2497 = vsel %vm2414, %v2366, 0
      %v2500 = vsel %vm2414, %v2367, 0
      %v2503 = vsel %vm2414, %v2368, 0
      %v2506 = vsel %vm2414, %v2369, 0
      %v2509 = vsel %vm2414, %v2370, 0
      %v2512 = vsel %vm2414, %v2371, 0
      %v2515 = vsel %vm2414, %v2372, 0
      %v2518 = vsel %vm2414, %v2373, 0
      %v2521 = vsel %vm2414, %v2374, 0
      %v2524 = vsel %vm2414, %v2375, 0
      %v2527 = vsel %vm2414, %v2376, 0
      %v2530 = vsel %vm2414, %v2377, 0
      %v2533 = vsel %vm2414, %v2378, 0
      %v2536 = vsel %vm2414, %v2379, 0
      %v2539 = vsel %vm2414, %v2380, 0
      %v2542 = vsel %vm2414, %v2381, 0
      %v2545 = vsel %vm2414, %v2382, 0
      %v2548 = vsel %vm2414, %v2383, 0
      %v2551 = vsel %vm2414, %v2384, 0
      %v2554 = vsel %vm2414, %v2385, 0
      %v2557 = vsel %vm2414, %v2386, 0
      %v2560 = vsel %vm2414, %v2387, 0
      %v2563 = vsel %vm2414, %v2388, 0
      %v2566 = vsel %vm2414, %v2389, 0
      %v2569 = vsel %vm2414, %v2390, 0
      %v2572 = vsel %vm2414, %v2391, 0
      %v2575 = vsel %vm2414, %v2392, 0
      %v2578 = vsel %vm2414, %v2393, 0
      %v2581 = vsel %vm2414, %v2394, 0
      %v2584 = vsel %vm2414, %v2395, 0
      %v2587 = vsel %vm2414, %v2396, 0
      %v2590 = vsel %vm2414, %v2397, 0
      %v2593 = vsel %vm2414, %v2398, 0
      %v2596 = vsel %vm2414, %v2399, 0
      %v2599 = vsel %vm2414, %v2400, 0
      %v2602 = vsel %vm2414, %v2401, 0
      %v2605 = vsel %vm2414, %v2402, 0
      %2607 = vmatprep.subr.mxu0 0.0
      %2608 = vmatpush1.msra.mxu0 %v2403
      %2609 = vmatprep.subr.mxu0 0.0
      %2610 = vmatpush1.msra.mxu0 %v2404
      %2611 = vmatprep.subr.mxu0 0.0
      %2612 = vmatpush1.msra.mxu0 %v2405
      %2613 = vmatprep.subr.mxu0 0.0
      %2614 = vmatpush1.msra.mxu0 %v2406
      %2615 = vmatprep.subr.mxu0 0.0
      %2616 = vmatpush1.msra.mxu0 0.0
      %2617 = vmatprep.subr.mxu0 0.0
      %2618 = vmatpush1.msra.mxu0 0.0
      %2619 = vmatprep.subr.mxu0 0.0
      %2620 = vmatpush1.msra.mxu0 0.0
      %2621 = vmatprep.subr.mxu0 0.0
      %2622 = vmatpush1.msra.mxu0 0.0
      %2623 = vmatprep.subr.mxu0 0.0
      %2624 = vmatpush1.msra.mxu0 0.0
      %2625 = vmatprep.subr.mxu0 0.0
      %2626 = vmatpush1.msra.mxu0 0.0
      %2627 = vmatprep.subr.mxu0 0.0
      %2628 = vmatpush1.msra.mxu0 0.0
      %2629 = vmatprep.subr.mxu0 0.0
      %2630 = vmatpush1.msra.mxu0 0.0
      %2631 = vmatprep.subr.mxu0 0.0
      %2632 = vmatpush1.msra.mxu0 0.0
      %2633 = vmatprep.subr.mxu0 0.0
      %2634 = vmatpush1.msra.mxu0 0.0
      %2635 = vmatprep.subr.mxu0 0.0
      %2636 = vmatpush1.msra.mxu0 0.0
      %2637 = vmatprep.subr.mxu0 0.0
      %2638 = vmatpush1.msra.mxu0 0.0
      %2639 = vmatprep.subr.mxu0 0.0
      %2640 = vmatpush1.msra.mxu0 0.0
      %2641 = vmatprep.subr.mxu0 0.0
      %2642 = vmatpush1.msra.mxu0 0.0
      %2643 = vmatprep.subr.mxu0 0.0
      %2644 = vmatpush1.msra.mxu0 0.0
      %2645 = vmatprep.subr.mxu0 0.0
      %2646 = vmatpush1.msra.mxu0 0.0
      %2647 = vmatprep.subr.mxu0 0.0
      %2648 = vmatpush1.msra.mxu0 0.0
      %2649 = vmatprep.subr.mxu0 0.0
      %2650 = vmatpush1.msra.mxu0 0.0
      %2651 = vmatprep.subr.mxu0 0.0
      %2652 = vmatpush1.msra.mxu0 0.0
      %2653 = vmatprep.subr.mxu0 0.0
      %2654 = vmatpush1.msra.mxu0 0.0
      %2655 = vmatprep.subr.mxu0 0.0
      %2656 = vmatpush1.msra.mxu0 0.0
      %2657 = vmatprep.subr.mxu0 0.0
      %2658 = vmatpush1.msra.mxu0 0.0
      %2659 = vmatprep.subr.mxu0 0.0
      %2660 = vmatpush1.msra.mxu0 0.0
      %2661 = vmatprep.subr.mxu0 0.0
      %2662 = vmatpush1.msra.mxu0 0.0
      %2663 = vmatprep.subr.mxu0 0.0
      %2664 = vmatpush1.msra.mxu0 0.0
      %2665 = vmatprep.subr.mxu0 0.0
      %2666 = vmatpush1.msra.mxu0 0.0
      %2667 = vmatprep.subr.mxu0 0.0
      %2668 = vmatpush1.msra.mxu0 0.0
      %2669 = vmatprep.subr.mxu0 0.0
      %2670 = vmatpush1.msra.mxu0 0.0
      %2671 = vmatprep.mubr.f32.mxu0 0.0
      %2672 = vmatmul.mubr.f32.gmra.mrb[0].mxu0 %v2416
      %v2673 = vpop.f32.mrb[0].mxu0
      %v2674 = vadd.f32 %v2412, %v2673
      %v2675 = vpop.f32.mrb[0].mxu0
      %2676 = vmatprep.mubr.f32.mxu0 0.0
      %2677 = vmatmul.mubr.f32.gmra.mrb[0].mxu0 %v2419
      %v2678 = vpop.f32.mrb[0].mxu0
      %v2679 = vadd.f32 %v2412, %v2678
      %v2680 = vpop.f32.mrb[0].mxu0
      %2681 = vmatprep.mubr.f32.mxu0 0.0
      %2682 = vmatmul.mubr.f32.gmra.mrb[0].mxu0 %v2422
      %v2683 = vpop.f32.mrb[0].mxu0
      %v2684 = vadd.f32 %v2412, %v2683
      %v2685 = vpop.f32.mrb[0].mxu0
      %2686 = vmatprep.mubr.f32.mxu0 0.0
      %2687 = vmatmul.mubr.f32.gmra.mrb[0].mxu0 %v2425
      %v2688 = vpop.f32.mrb[0].mxu0
      %v2689 = vadd.f32 %v2412, %v2688
      %v2690 = vpop.f32.mrb[0].mxu0
      %2691 = vmatprep.mubr.f32.mxu0 0.0
      %2692 = vmatmul.mubr.f32.gmra.mrb[0].mxu0 %v2428
      %v2693 = vpop.f32.mrb[0].mxu0
      %v2694 = vadd.f32 %v2412, %v2693
      %v2695 = vpop.f32.mrb[0].mxu0
      %2696 = vmatprep.mubr.f32.mxu0 0.0
      %2697 = vmatmul.mubr.f32.gmra.mrb[0].mxu0 %v2431
      %v2698 = vpop.f32.mrb[0].mxu0
      %v2699 = vadd.f32 %v2412, %v2698
      %v2700 = vpop.f32.mrb[0].mxu0
      %2701 = vmatprep.mubr.f32.mxu0 0.0
      %2702 = vmatmul.mubr.f32.gmra.mrb[0].mxu0 %v2434
      %v2703 = vpop.f32.mrb[0].mxu0
      %v2704 = vadd.f32 %v2412, %v2703
      %v2705 = vpop.f32.mrb[0].mxu0
      %2706 = vmatprep.mubr.f32.mxu0 0.0
      %2707 = vmatmul.mubr.f32.gmra.mrb[0].mxu0 %v2437
      %v2708 = vpop.f32.mrb[0].mxu0
      %v2709 = vadd.f32 %v2412, %v2708
      %v2710 = vpop.f32.mrb[0].mxu0
      %2711 = vmatprep.mubr.f32.mxu0 0.0
      %2712 = vmatmul.mubr.f32.gmra.mrb[0].mxu0 %v2440
      %v2713 = vpop.f32.mrb[0].mxu0
      %v2714 = vadd.f32 %v2412, %v2713
      %v2715 = vpop.f32.mrb[0].mxu0
      %2716 = vmatprep.mubr.f32.mxu0 0.0
      %2717 = vmatmul.mubr.f32.gmra.mrb[0].mxu0 %v2443
      %v2718 = vpop.f32.mrb[0].mxu0
      %v2719 = vadd.f32 %v2412, %v2718
      %v2720 = vpop.f32.mrb[0].mxu0
      %2721 = vmatprep.mubr.f32.mxu0 0.0
      %2722 = vmatmul.mubr.f32.gmra.mrb[0].mxu0 %v2446
      %v2723 = vpop.f32.mrb[0].mxu0
      %v2724 = vadd.f32 %v2412, %v2723
      %v2725 = vpop.f32.mrb[0].mxu0
      %2726 = vmatprep.mubr.f32.mxu0 0.0
      %2727 = vmatmul.mubr.f32.gmra.mrb[0].mxu0 %v2449
      %v2728 = vpop.f32.mrb[0].mxu0
      %v2729 = vadd.f32 %v2412, %v2728
      %v2730 = vpop.f32.mrb[0].mxu0
      %2731 = vmatprep.mubr.f32.mxu0 0.0
      %2732 = vmatmul.mubr.f32.gmra.mrb[0].mxu0 %v2452
      %v2733 = vpop.f32.mrb[0].mxu0
      %v2734 = vadd.f32 %v2412, %v2733
      %v2735 = vpop.f32.mrb[0].mxu0
      %2736 = vmatprep.mubr.f32.mxu0 0.0
      %2737 = vmatmul.mubr.f32.gmra.mrb[0].mxu0 %v2455
      %v2738 = vpop.f32.mrb[0].mxu0
      %v2739 = vadd.f32 %v2412, %v2738
      %v2740 = vpop.f32.mrb[0].mxu0
      %2741 = vmatprep.mubr.f32.mxu0 0.0
      %2742 = vmatmul.mubr.f32.gmra.mrb[0].mxu0 %v2458
      %v2743 = vpop.f32.mrb[0].mxu0
      %v2744 = vadd.f32 %v2412, %v2743
      %v2745 = vpop.f32.mrb[0].mxu0
      %2746 = vmatprep.mubr.f32.mxu0 0.0
      %2747 = vmatmul.mubr.f32.gmra.mrb[0].mxu0 %v2461
      %v2748 = vpop.f32.mrb[0].mxu0
      %v2749 = vadd.f32 %v2412, %v2748
      %v2750 = vpop.f32.mrb[0].mxu0
      %2751 = vmatprep.mubr.f32.mxu0 0.0
      %2752 = vmatmul.mubr.f32.gmra.mrb[0].mxu0 %v2464
      %v2753 = vpop.f32.mrb[0].mxu0
      %v2754 = vadd.f32 %v2412, %v2753
      %v2755 = vpop.f32.mrb[0].mxu0
      %2756 = vmatprep.mubr.f32.mxu0 0.0
      %2757 = vmatmul.mubr.f32.gmra.mrb[0].mxu0 %v2467
      %v2758 = vpop.f32.mrb[0].mxu0
      %v2759 = vadd.f32 %v2412, %v2758
      %v2760 = vpop.f32.mrb[0].mxu0
      %2761 = vmatprep.mubr.f32.mxu0 0.0
      %2762 = vmatmul.mubr.f32.gmra.mrb[0].mxu0 %v2470
      %v2763 = vpop.f32.mrb[0].mxu0
      %v2764 = vadd.f32 %v2412, %v2763
      %v2765 = vpop.f32.mrb[0].mxu0
      %2766 = vmatprep.mubr.f32.mxu0 0.0
      %2767 = vmatmul.mubr.f32.gmra.mrb[0].mxu0 %v2473
      %v2768 = vpop.f32.mrb[0].mxu0
      %v2769 = vadd.f32 %v2412, %v2768
      %v2770 = vpop.f32.mrb[0].mxu0
      %2771 = vmatprep.mubr.f32.mxu0 0.0
      %2772 = vmatmul.mubr.f32.gmra.mrb[0].mxu0 %v2476
      %v2773 = vpop.f32.mrb[0].mxu0
      %v2774 = vadd.f32 %v2412, %v2773
      %v2775 = vpop.f32.mrb[0].mxu0
      %2776 = vmatprep.mubr.f32.mxu0 0.0
      %2777 = vmatmul.mubr.f32.gmra.mrb[0].mxu0 %v2479
      %v2778 = vpop.f32.mrb[0].mxu0
      %v2779 = vadd.f32 %v2412, %v2778
      %v2780 = vpop.f32.mrb[0].mxu0
      %2781 = vmatprep.mubr.f32.mxu0 0.0
      %2782 = vmatmul.mubr.f32.gmra.mrb[0].mxu0 %v2482
      %v2783 = vpop.f32.mrb[0].mxu0
      %v2784 = vadd.f32 %v2412, %v2783
      %v2785 = vpop.f32.mrb[0].mxu0
      %2786 = vmatprep.mubr.f32.mxu0 0.0
      %2787 = vmatmul.mubr.f32.gmra.mrb[0].mxu0 %v2485
      %v2788 = vpop.f32.mrb[0].mxu0
      %v2789 = vadd.f32 %v2412, %v2788
      %v2790 = vpop.f32.mrb[0].mxu0
      %2791 = vmatprep.mubr.f32.mxu0 0.0
      %2792 = vmatmul.mubr.f32.gmra.mrb[0].mxu0 %v2488
      %v2793 = vpop.f32.mrb[0].mxu0
      %v2794 = vadd.f32 %v2412, %v2793
      %v2795 = vpop.f32.mrb[0].mxu0
      %2796 = vmatprep.mubr.f32.mxu0 0.0
      %2797 = vmatmul.mubr.f32.gmra.mrb[0].mxu0 %v2491
      %v2798 = vpop.f32.mrb[0].mxu0
      %v2799 = vadd.f32 %v2412, %v2798
      %v2800 = vpop.f32.mrb[0].mxu0
      %2801 = vmatprep.mubr.f32.mxu0 0.0
      %2802 = vmatmul.mubr.f32.gmra.mrb[0].mxu0 %v2494
      %v2803 = vpop.f32.mrb[0].mxu0
      %v2804 = vadd.f32 %v2412, %v2803
      %v2805 = vpop.f32.mrb[0].mxu0
      %2806 = vmatprep.mubr.f32.mxu0 0.0
      %2807 = vmatmul.mubr.f32.gmra.mrb[0].mxu0 %v2497
      %v2808 = vpop.f32.mrb[0].mxu0
      %v2809 = vadd.f32 %v2412, %v2808
      %v2810 = vpop.f32.mrb[0].mxu0
      %2811 = vmatprep.mubr.f32.mxu0 0.0
      %2812 = vmatmul.mubr.f32.gmra.mrb[0].mxu0 %v2500
      %v2813 = vpop.f32.mrb[0].mxu0
      %v2814 = vadd.f32 %v2412, %v2813
      %v2815 = vpop.f32.mrb[0].mxu0
      %2816 = vmatprep.mubr.f32.mxu0 0.0
      %2817 = vmatmul.mubr.f32.gmra.mrb[0].mxu0 %v2503
      %v2818 = vpop.f32.mrb[0].mxu0
      %v2819 = vadd.f32 %v2412, %v2818
      %v2820 = vpop.f32.mrb[0].mxu0
      %2821 = vmatprep.mubr.f32.mxu0 0.0
      %2822 = vmatmul.mubr.f32.gmra.mrb[0].mxu0 %v2506
      %v2823 = vpop.f32.mrb[0].mxu0
      %v2824 = vadd.f32 %v2412, %v2823
      %v2825 = vpop.f32.mrb[0].mxu0
      %2826 = vmatprep.mubr.f32.mxu0 0.0
      %2827 = vmatmul.mubr.f32.gmra.mrb[0].mxu0 %v2509
      %v2828 = vpop.f32.mrb[0].mxu0
      %v2829 = vadd.f32 %v2412, %v2828
      %v2830 = vpop.f32.mrb[0].mxu0
      %2831 = vmatprep.mubr.f32.mxu0 0.0
      %2832 = vmatmul.mubr.f32.gmra.mrb[0].mxu0 %v2512
      %v2833 = vpop.f32.mrb[0].mxu0
      %v2834 = vadd.f32 %v2412, %v2833
      %v2835 = vpop.f32.mrb[0].mxu0
      %2836 = vmatprep.mubr.f32.mxu0 0.0
      %2837 = vmatmul.mubr.f32.gmra.mrb[0].mxu0 %v2515
      %v2838 = vpop.f32.mrb[0].mxu0
      %v2839 = vadd.f32 %v2412, %v2838
      %v2840 = vpop.f32.mrb[0].mxu0
      %2841 = vmatprep.mubr.f32.mxu0 0.0
      %2842 = vmatmul.mubr.f32.gmra.mrb[0].mxu0 %v2518
      %v2843 = vpop.f32.mrb[0].mxu0
      %v2844 = vadd.f32 %v2412, %v2843
      %v2845 = vpop.f32.mrb[0].mxu0
      %2846 = vmatprep.mubr.f32.mxu0 0.0
      %2847 = vmatmul.mubr.f32.gmra.mrb[0].mxu0 %v2521
      %v2848 = vpop.f32.mrb[0].mxu0
      %v2849 = vadd.f32 %v2412, %v2848
      %v2850 = vpop.f32.mrb[0].mxu0
      %2851 = vmatprep.mubr.f32.mxu0 0.0
      %2852 = vmatmul.mubr.f32.gmra.mrb[0].mxu0 %v2524
      %v2853 = vpop.f32.mrb[0].mxu0
      %v2854 = vadd.f32 %v2412, %v2853
      %v2855 = vpop.f32.mrb[0].mxu0
      %2856 = vmatprep.mubr.f32.mxu0 0.0
      %2857 = vmatmul.mubr.f32.gmra.mrb[0].mxu0 %v2527
      %v2858 = vpop.f32.mrb[0].mxu0
      %v2859 = vadd.f32 %v2412, %v2858
      %v2860 = vpop.f32.mrb[0].mxu0
      %2861 = vmatprep.mubr.f32.mxu0 0.0
      %2862 = vmatmul.mubr.f32.gmra.mrb[0].mxu0 %v2530
      %v2863 = vpop.f32.mrb[0].mxu0
      %v2864 = vadd.f32 %v2412, %v2863
      %v2865 = vpop.f32.mrb[0].mxu0
      %2866 = vmatprep.mubr.f32.mxu0 0.0
      %2867 = vmatmul.mubr.f32.gmra.mrb[0].mxu0 %v2533
      %v2868 = vpop.f32.mrb[0].mxu0
      %v2869 = vadd.f32 %v2412, %v2868
      %v2870 = vpop.f32.mrb[0].mxu0
      %2871 = vmatprep.mubr.f32.mxu0 0.0
      %2872 = vmatmul.mubr.f32.gmra.mrb[0].mxu0 %v2536
      %v2873 = vpop.f32.mrb[0].mxu0
      %v2874 = vadd.f32 %v2412, %v2873
      %v2875 = vpop.f32.mrb[0].mxu0
      %2876 = vmatprep.mubr.f32.mxu0 0.0
      %2877 = vmatmul.mubr.f32.gmra.mrb[0].mxu0 %v2539
      %v2878 = vpop.f32.mrb[0].mxu0
      %v2879 = vadd.f32 %v2412, %v2878
      %v2880 = vpop.f32.mrb[0].mxu0
      %2881 = vmatprep.mubr.f32.mxu0 0.0
      %2882 = vmatmul.mubr.f32.gmra.mrb[0].mxu0 %v2542
      %v2883 = vpop.f32.mrb[0].mxu0
      %v2884 = vadd.f32 %v2412, %v2883
      %v2885 = vpop.f32.mrb[0].mxu0
      %2886 = vmatprep.mubr.f32.mxu0 0.0
      %2887 = vmatmul.mubr.f32.gmra.mrb[0].mxu0 %v2545
      %v2888 = vpop.f32.mrb[0].mxu0
      %v2889 = vadd.f32 %v2412, %v2888
      %v2890 = vpop.f32.mrb[0].mxu0
      %2891 = vmatprep.mubr.f32.mxu0 0.0
      %2892 = vmatmul.mubr.f32.gmra.mrb[0].mxu0 %v2548
      %v2893 = vpop.f32.mrb[0].mxu0
      %v2894 = vadd.f32 %v2412, %v2893
      %v2895 = vpop.f32.mrb[0].mxu0
      %2896 = vmatprep.mubr.f32.mxu0 0.0
      %2897 = vmatmul.mubr.f32.gmra.mrb[0].mxu0 %v2551
      %v2898 = vpop.f32.mrb[0].mxu0
      %v2899 = vadd.f32 %v2412, %v2898
      %v2900 = vpop.f32.mrb[0].mxu0
      %2901 = vmatprep.mubr.f32.mxu0 0.0
      %2902 = vmatmul.mubr.f32.gmra.mrb[0].mxu0 %v2554
      %v2903 = vpop.f32.mrb[0].mxu0
      %v2904 = vadd.f32 %v2412, %v2903
      %v2905 = vpop.f32.mrb[0].mxu0
      %2906 = vmatprep.mubr.f32.mxu0 0.0
      %2907 = vmatmul.mubr.f32.gmra.mrb[0].mxu0 %v2557
      %v2908 = vpop.f32.mrb[0].mxu0
      %v2909 = vadd.f32 %v2412, %v2908
      %v2910 = vpop.f32.mrb[0].mxu0
      %2911 = vmatprep.mubr.f32.mxu0 0.0
      %2912 = vmatmul.mubr.f32.gmra.mrb[0].mxu0 %v2560
      %v2913 = vpop.f32.mrb[0].mxu0
      %v2914 = vadd.f32 %v2412, %v2913
      %v2915 = vpop.f32.mrb[0].mxu0
      %2916 = vmatprep.mubr.f32.mxu0 0.0
      %2917 = vmatmul.mubr.f32.gmra.mrb[0].mxu0 %v2563
      %v2918 = vpop.f32.mrb[0].mxu0
      %v2919 = vadd.f32 %v2412, %v2918
      %v2920 = vpop.f32.mrb[0].mxu0
      %2921 = vmatprep.mubr.f32.mxu0 0.0
      %2922 = vmatmul.mubr.f32.gmra.mrb[0].mxu0 %v2566
      %v2923 = vpop.f32.mrb[0].mxu0
      %v2924 = vadd.f32 %v2412, %v2923
      %v2925 = vpop.f32.mrb[0].mxu0
      %2926 = vmatprep.mubr.f32.mxu0 0.0
      %2927 = vmatmul.mubr.f32.gmra.mrb[0].mxu0 %v2569
      %v2928 = vpop.f32.mrb[0].mxu0
      %v2929 = vadd.f32 %v2412, %v2928
      %v2930 = vpop.f32.mrb[0].mxu0
      %2931 = vmatprep.mubr.f32.mxu0 0.0
      %2932 = vmatmul.mubr.f32.gmra.mrb[0].mxu0 %v2572
      %v2933 = vpop.f32.mrb[0].mxu0
      %v2934 = vadd.f32 %v2412, %v2933
      %v2935 = vpop.f32.mrb[0].mxu0
      %2936 = vmatprep.mubr.f32.mxu0 0.0
      %2937 = vmatmul.mubr.f32.gmra.mrb[0].mxu0 %v2575
      %v2938 = vpop.f32.mrb[0].mxu0
      %v2939 = vadd.f32 %v2412, %v2938
      %v2940 = vpop.f32.mrb[0].mxu0
      %2941 = vmatprep.mubr.f32.mxu0 0.0
      %2942 = vmatmul.mubr.f32.gmra.mrb[0].mxu0 %v2578
      %v2943 = vpop.f32.mrb[0].mxu0
      %v2944 = vadd.f32 %v2412, %v2943
      %v2945 = vpop.f32.mrb[0].mxu0
      %2946 = vmatprep.mubr.f32.mxu0 0.0
      %2947 = vmatmul.mubr.f32.gmra.mrb[0].mxu0 %v2581
      %v2948 = vpop.f32.mrb[0].mxu0
      %v2949 = vadd.f32 %v2412, %v2948
      %v2950 = vpop.f32.mrb[0].mxu0
      %2951 = vmatprep.mubr.f32.mxu0 0.0
      %2952 = vmatmul.mubr.f32.gmra.mrb[0].mxu0 %v2584
      %v2953 = vpop.f32.mrb[0].mxu0
      %v2954 = vadd.f32 %v2412, %v2953
      %v2955 = vpop.f32.mrb[0].mxu0
      %2956 = vmatprep.mubr.f32.mxu0 0.0
      %2957 = vmatmul.mubr.f32.gmra.mrb[0].mxu0 %v2587
      %v2958 = vpop.f32.mrb[0].mxu0
      %v2959 = vadd.f32 %v2412, %v2958
      %v2960 = vpop.f32.mrb[0].mxu0
      %2961 = vmatprep.mubr.f32.mxu0 0.0
      %2962 = vmatmul.mubr.f32.gmra.mrb[0].mxu0 %v2590
      %v2963 = vpop.f32.mrb[0].mxu0
      %v2964 = vadd.f32 %v2412, %v2963
      %v2965 = vpop.f32.mrb[0].mxu0
      %2966 = vmatprep.mubr.f32.mxu0 0.0
      %2967 = vmatmul.mubr.f32.gmra.mrb[0].mxu0 %v2593
      %v2968 = vpop.f32.mrb[0].mxu0
      %v2969 = vadd.f32 %v2412, %v2968
      %v2970 = vpop.f32.mrb[0].mxu0
      %2971 = vmatprep.mubr.f32.mxu0 0.0
      %2972 = vmatmul.mubr.f32.gmra.mrb[0].mxu0 %v2596
      %v2973 = vpop.f32.mrb[0].mxu0
      %v2974 = vadd.f32 %v2412, %v2973
      %v2975 = vpop.f32.mrb[0].mxu0
      %2976 = vmatprep.mubr.f32.mxu0 0.0
      %2977 = vmatmul.mubr.f32.gmra.mrb[0].mxu0 %v2599
      %v2978 = vpop.f32.mrb[0].mxu0
      %v2979 = vadd.f32 %v2412, %v2978
      %v2980 = vpop.f32.mrb[0].mxu0
      %2981 = vmatprep.mubr.f32.mxu0 0.0
      %2982 = vmatmul.mubr.f32.gmra.mrb[0].mxu0 %v2602
      %v2983 = vpop.f32.mrb[0].mxu0
      %v2984 = vadd.f32 %v2412, %v2983
      %v2985 = vpop.f32.mrb[0].mxu0
      %2986 = vmatprep.mubr.f32.mxu0 0.0
      %2987 = vmatmul.mubr.f32.gmra.mrb[0].mxu0 %v2605
      %v2988 = vpop.f32.mrb[0].mxu0
      %v2989 = vadd.f32 %v2412, %v2988
      %v2990 = vpop.f32.mrb[0].mxu0
      %2991 = vdwg.mxu0
      %v2992 = vtanh.pop %v2674
      %v2993 = vtanh.pop %v2679
      %v2994 = vtanh.pop %v2684
      %v2995 = vtanh.pop %v2689
      %v2996 = vtanh.pop %v2694
      %v2997 = vtanh.pop %v2699
      %v2998 = vtanh.pop %v2704
      %v2999 = vtanh.pop %v2709
      %v3000 = vtanh.pop %v2714
      %v3001 = vtanh.pop %v2719
      %v3002 = vtanh.pop %v2724
      %v3003 = vtanh.pop %v2729
      %v3004 = vtanh.pop %v2734
      %v3005 = vtanh.pop %v2739
      %v3006 = vtanh.pop %v2744
      %v3007 = vtanh.pop %v2749
      %v3008 = vtanh.pop %v2754
      %v3009 = vtanh.pop %v2759
      %v3010 = vtanh.pop %v2764
      %v3011 = vtanh.pop %v2769
      %v3012 = vtanh.pop %v2774
      %v3013 = vtanh.pop %v2779
      %v3014 = vtanh.pop %v2784
      %v3015 = vtanh.pop %v2789
      %v3016 = vtanh.pop %v2794
      %v3017 = vtanh.pop %v2799
      %v3018 = vtanh.pop %v2804
      %v3019 = vtanh.pop %v2809
      %v3020 = vtanh.pop %v2814
      %v3021 = vtanh.pop %v2819
      %v3022 = vtanh.pop %v2824
      %v3023 = vtanh.pop %v2829
      %v3024 = vtanh.pop %v2834
      %v3025 = vtanh.pop %v2839
      %v3026 = vtanh.pop %v2844
      %v3027 = vtanh.pop %v2849
      %v3028 = vtanh.pop %v2854
      %v3029 = vtanh.pop %v2859
      %v3030 = vtanh.pop %v2864
      %v3031 = vtanh.pop %v2869
      %v3032 = vtanh.pop %v2874
      %v3033 = vtanh.pop %v2879
      %v3034 = vtanh.pop %v2884
      %v3035 = vtanh.pop %v2889
      %v3036 = vtanh.pop %v2894
      %v3037 = vtanh.pop %v2899
      %v3038 = vtanh.pop %v2904
      %v3039 = vtanh.pop %v2909
      %v3040 = vtanh.pop %v2914
      %v3041 = vtanh.pop %v2919
      %v3042 = vtanh.pop %v2924
      %v3043 = vtanh.pop %v2929
      %v3044 = vtanh.pop %v2934
      %v3045 = vtanh.pop %v2939
      %v3046 = vtanh.pop %v2944
      %v3047 = vtanh.pop %v2949
      %v3048 = vtanh.pop %v2954
      %v3049 = vtanh.pop %v2959
      %v3050 = vtanh.pop %v2964
      %v3051 = vtanh.pop %v2969
      %v3052 = vtanh.pop %v2974
      %v3053 = vtanh.pop %v2979
      %v3054 = vtanh.pop %v2984
      %v3055 = vtanh.pop %v2989
      %vm3056 = vcmask 64512
      %3057 = vst.msk [vmem:[%s329] sm:$0xff] %vm3056, %v2992
      %3058 = vst.msk [vmem:[%s329 + $0x8] sm:$0xff] %vm3056, %v2993
      %3059 = vst.msk [vmem:[%s329 + $0x10] sm:$0xff] %vm3056, %v2994
      %3060 = vst.msk [vmem:[%s329 + $0x18] sm:$0xff] %vm3056, %v2995
      %3061 = vst.msk [vmem:[%s329 + $0x20] sm:$0xff] %vm3056, %v2996
      %3062 = vst.msk [vmem:[%s329 + $0x28] sm:$0xff] %vm3056, %v2997
      %3063 = vst.msk [vmem:[%s329 + $0x30] sm:$0xff] %vm3056, %v2998
      %3064 = vst.msk [vmem:[%s329 + $0x38] sm:$0xff] %vm3056, %v2999
      %3065 = vst.msk [vmem:[%s329 + $0x40] sm:$0xff] %vm3056, %v3000
      %3066 = vst.msk [vmem:[%s329 + $0x48] sm:$0xff] %vm3056, %v3001
      %3067 = vst.msk [vmem:[%s329 + $0x50] sm:$0xff] %vm3056, %v3002
      %3068 = vst.msk [vmem:[%s329 + $0x58] sm:$0xff] %vm3056, %v3003
      %3069 = vst.msk [vmem:[%s329 + $0x60] sm:$0xff] %vm3056, %v3004
      %3070 = vst.msk [vmem:[%s329 + $0x68] sm:$0xff] %vm3056, %v3005
      %3071 = vst.msk [vmem:[%s329 + $0x70] sm:$0xff] %vm3056, %v3006
      %3072 = vst.msk [vmem:[%s329 + $0x78] sm:$0xff] %vm3056, %v3007
      %3073 = vst.msk [vmem:[%s329 + $0x80] sm:$0xff] %vm3056, %v3008
      %3074 = vst.msk [vmem:[%s329 + $0x88] sm:$0xff] %vm3056, %v3009
      %3075 = vst.msk [vmem:[%s329 + $0x90] sm:$0xff] %vm3056, %v3010
      %3076 = vst.msk [vmem:[%s329 + $0x98] sm:$0xff] %vm3056, %v3011
      %3077 = vst.msk [vmem:[%s329 + $0xa0] sm:$0xff] %vm3056, %v3012
      %3078 = vst.msk [vmem:[%s329 + $0xa8] sm:$0xff] %vm3056, %v3013
      %3079 = vst.msk [vmem:[%s329 + $0xb0] sm:$0xff] %vm3056, %v3014
      %3080 = vst.msk [vmem:[%s329 + $0xb8] sm:$0xff] %vm3056, %v3015
      %3081 = vst.msk [vmem:[%s329 + $0xc0] sm:$0xff] %vm3056, %v3016
      %3082 = vst.msk [vmem:[%s329 + $0xc8] sm:$0xff] %vm3056, %v3017
      %3083 = vst.msk [vmem:[%s329 + $0xd0] sm:$0xff] %vm3056, %v3018
      %3084 = vst.msk [vmem:[%s329 + $0xd8] sm:$0xff] %vm3056, %v3019
      %3085 = vst.msk [vmem:[%s329 + $0xe0] sm:$0xff] %vm3056, %v3020
      %3086 = vst.msk [vmem:[%s329 + $0xe8] sm:$0xff] %vm3056, %v3021
      %3087 = vst.msk [vmem:[%s329 + $0xf0] sm:$0xff] %vm3056, %v3022
      %3088 = vst.msk [vmem:[%s329 + $0xf8] sm:$0xff] %vm3056, %v3023
      %3089 = vst.msk [vmem:[%s329 + $0x100] sm:$0xff] %vm3056, %v3024
      %3090 = vst.msk [vmem:[%s329 + $0x108] sm:$0xff] %vm3056, %v3025
      %3091 = vst.msk [vmem:[%s329 + $0x110] sm:$0xff] %vm3056, %v3026
      %3092 = vst.msk [vmem:[%s329 + $0x118] sm:$0xff] %vm3056, %v3027
      %3093 = vst.msk [vmem:[%s329 + $0x120] sm:$0xff] %vm3056, %v3028
      %3094 = vst.msk [vmem:[%s329 + $0x128] sm:$0xff] %vm3056, %v3029
      %3095 = vst.msk [vmem:[%s329 + $0x130] sm:$0xff] %vm3056, %v3030
      %3096 = vst.msk [vmem:[%s329 + $0x138] sm:$0xff] %vm3056, %v3031
      %3097 = vst.msk [vmem:[%s329 + $0x140] sm:$0xff] %vm3056, %v3032
      %3098 = vst.msk [vmem:[%s329 + $0x148] sm:$0xff] %vm3056, %v3033
      %3099 = vst.msk [vmem:[%s329 + $0x150] sm:$0xff] %vm3056, %v3034
      %3100 = vst.msk [vmem:[%s329 + $0x158] sm:$0xff] %vm3056, %v3035
      %3101 = vst.msk [vmem:[%s329 + $0x160] sm:$0xff] %vm3056, %v3036
      %3102 = vst.msk [vmem:[%s329 + $0x168] sm:$0xff] %vm3056, %v3037
      %3103 = vst.msk [vmem:[%s329 + $0x170] sm:$0xff] %vm3056, %v3038
      %3104 = vst.msk [vmem:[%s329 + $0x178] sm:$0xff] %vm3056, %v3039
      %3105 = vst.msk [vmem:[%s329 + $0x180] sm:$0xff] %vm3056, %v3040
      %3106 = vst.msk [vmem:[%s329 + $0x188] sm:$0xff] %vm3056, %v3041
      %3107 = vst.msk [vmem:[%s329 + $0x190] sm:$0xff] %vm3056, %v3042
      %3108 = vst.msk [vmem:[%s329 + $0x198] sm:$0xff] %vm3056, %v3043
      %3109 = vst.msk [vmem:[%s329 + $0x1a0] sm:$0xff] %vm3056, %v3044
      %3110 = vst.msk [vmem:[%s329 + $0x1a8] sm:$0xff] %vm3056, %v3045
      %3111 = vst.msk [vmem:[%s329 + $0x1b0] sm:$0xff] %vm3056, %v3046
      %3112 = vst.msk [vmem:[%s329 + $0x1b8] sm:$0xff] %vm3056, %v3047
      %3113 = vst.msk [vmem:[%s329 + $0x1c0] sm:$0xff] %vm3056, %v3048
      %3114 = vst.msk [vmem:[%s329 + $0x1c8] sm:$0xff] %vm3056, %v3049
      %3115 = vst.msk [vmem:[%s329 + $0x1d0] sm:$0xff] %vm3056, %v3050
      %3116 = vst.msk [vmem:[%s329 + $0x1d8] sm:$0xff] %vm3056, %v3051
      %3117 = vst.msk [vmem:[%s329 + $0x1e0] sm:$0xff] %vm3056, %v3052
      %3118 = vst.msk [vmem:[%s329 + $0x1e8] sm:$0xff] %vm3056, %v3053
      %3119 = vst.msk [vmem:[%s329 + $0x1f0] sm:$0xff] %vm3056, %v3054
      %3120 = vst.msk [vmem:[%s329 + $0x1f8] sm:$0xff] %vm3056, %v3055
      %s3121 = smul.u32 64, %s19
      %p3122 = scmp.lt.s32.totalorder %s3121, 127
      %s3123 = scalar_select %p3122, %s3121, 127
      %s3124 = smul.addr %s3123, 8
      %s3125 = scalar_lea.vmem %s8, %s3124
      // Predicated region
      $region53: #{tpu_custom_call.1} parent=51 // pred_check
        %p3126 = pneg %p215
      $region54: #{tpu_custom_call.1} parent=51 // pred_check_branch
        %3128 = sbr.rel (%p3126) target = $region56
      $region55: #{tpu_custom_call.1} parent=51 // pred_region
        %s3129 = smul.u32 64, %s19
      $region56: #{tpu_custom_call.1} parent=51 // pred_fallthru
        _
    $region52: #{tpu_custom_call.1} parent=5 // pred_fallthru
      _
    %p3130 = scmp.le.s32.totalorder 2, %s14
    // Predicated region
    $region57: #{tpu_custom_call.1} parent=5 // pred_check
      %p3131 = pneg %p3130
    $region58: #{tpu_custom_call.1} parent=5 // pred_check_branch
      %3133 = sbr.rel (%p3131) target = $region60
    $region59: #{tpu_custom_call.1} parent=5 // pred_region
      %s3134 = ssub.s32 %s14, 2
      // Predicated region
      $region61: #{tpu_custom_call.1} parent=59 // pred_check
        %p3135 = pneg %p221
      $region62: #{tpu_custom_call.1} parent=59 // pred_check_branch
        %3137 = sbr.rel (%p3135) target = $region64
      $region63: #{tpu_custom_call.1} parent=59 // pred_region
        %s3138 = smul.u32 64, %s20
        %p3139 = scmp.lt.s32.totalorder %s3138, 127
        %s3140 = scalar_select %p3139, %s3138, 127
        %s3141 = smul.addr %s3140, 8
        %s3142 = scalar_lea.vmem %s8, %s3141
      $region64: #{tpu_custom_call.1} parent=59 // pred_fallthru
        _
    $region60: #{tpu_custom_call.1} parent=5 // pred_fallthru
      _
  $region6: #{tpu_custom_call.1} parent=0 // loop_footer
    %s18 = sadd.s32 1, %s14
  $region7: #{tpu_custom_call.1} parent=0 // loop_footer_branch
    %13 = sbr.rel target = $region3
  $region8: #{tpu_custom_call.1} parent=0 // loop_exit
    _

</llo_original>
